<compile_context>
chip_gen: v7x
topology: tpu7x:2x2x1
jax: 0.10.0
libtpu: 0.0.40
codegen_flags: <defaults>
</compile_context>

<pallas_src>
import functools

import jax
import jax.numpy as jnp
import numpy as np
from jax.experimental import pallas as pl
from jax.experimental.pallas import tpu as pltpu

FEAT_DIM = 1000          # backbone output features (GENet -> 1000)
FEAT_PAD = 1024          # zero-padded so the contraction dim is 128-aligned
HID_DIM = 256
HID_FUSED = 2 * HID_DIM  # both heads' first layers fused
CLASS_1 = 4
CLASS_2 = 3
OUT_PAD = 128            # lane-dense logits slab; c1/c2 sliced outside
DROP_P = 0.4
LANE_CHUNK = 2048        # lanes per spatial-reduction step (bounds live values)


def _round_up(n, m):
    return ((n + m - 1) // m) * m


def _vmem_capacity_bytes():
    """Per-core VMEM capacity; conservative (v7x) fallback if query fails."""
    try:
        cap = getattr(pltpu.get_tpu_info(), "vmem_capacity_bytes", None)
        if cap:
            return int(cap)
    except Exception:
        pass
    return 64 * 1024 * 1024


def mynet_kernel(seed_ref,                       # scalar prefetch (SMEM)
                 x_ref, wp_ref, bp_ref,          # inputs (VMEM)
                 w1_ref, b1_ref, w2_ref, b2_ref,
                 out_ref,                        # output (VMEM)
                 *, training: bool, drop_p: float, c_in: int,
                 hw_pad: int, chunk: int):
    # ---- backbone ----
    # TODO(synk): pretrained GENet backbone is not reproducible from the module
    # source; stand-in = global-average-pool + Linear(C -> 1000) + ReLU.
    # The 1/(H*W) mean scale is folded into wp so only per-channel spatial sums
    # are needed.  K = C (= 3) is far too shallow for the MXU, so the
    # projection is done as C broadcast FMAs on the VPU instead.
    tb = out_ref.shape[0]
    wp = wp_ref[...]                                      # (C, 1024) f32
    acc = jnp.zeros((tb, wp.shape[1]), jnp.float32)
    for c in range(c_in):                                 # static unrolled (C tiny)
        base = c * hw_pad                                 # 128-aligned lane offset
        s_c = jnp.zeros((tb, 1), jnp.float32)
        off = 0
        while off < hw_pad:                               # chunked lane reduction
            width = min(chunk, hw_pad - off)              # bounds the live value
            s_c = s_c + jnp.sum(x_ref[:, base + off:base + off + width],
                                axis=-1, keepdims=True)
            off += width
        acc = acc + s_c * wp[c:c + 1, :]                  # (TB,1)*(1,1024) FMA
    feat = jnp.maximum(acc + bp_ref[...], 0.0)            # (TB, 1024) f32
    # torch.flatten(x, 1) is an identity on a (B, 1000) feature tensor.

    # ---- fused classifier heads: one (TB,1024)@(1024,512) MXU pass ----
    h = jnp.dot(feat.astype(jnp.bfloat16), w1_ref[...],
                preferred_element_type=jnp.float32) + b1_ref[...]
    h = jnp.maximum(h, 0.0)                               # (TB, 512) f32

    if training:
        # Inverted dropout, one mask for both heads' fused hidden.
        pltpu.prng_seed(seed_ref[0] + pl.program_id(0))
        bits = pltpu.bitcast(pltpu.prng_random_bits(h.shape), jnp.uint32)
        threshold = jnp.uint32(int(round(drop_p * 4294967296.0)))
        keep = bits >= threshold                          # P(keep) = 1 - p
        h = jnp.where(keep, h * (1.0 / (1.0 - drop_p)), 0.0)

    # Block-diagonal second layer: rows 0:256 -> cols 0:4 (head 1),
    # rows 256:512 -> cols 4:7 (head 2), everything else zero.  One lane-dense
    # (TB, 128) store instead of two masked (TB,4)/(TB,3) stores.
    out_ref[...] = jnp.dot(h.astype(jnp.bfloat16), w2_ref[...],
                           preferred_element_type=jnp.float32) + b2_ref[...]


def mynet_forward(x_nchw, packed, *, training=False, seed=0):
    """x_nchw: (B, C, H, W) float32.  Returns (c1, c2) = ((B,4), (B,3))."""
    B, C, H, W = x_nchw.shape
    HW = H * W
    HW_pad = _round_up(HW, 128)
    D = C * HW_pad

    # Flatten to a dense 2D f32 slab; no dtype cast (HBM-bound: read x once at
    # 4 B/elem).  Spatial zero-pad only if HW is not already 128-aligned, so
    # per-channel lane slices inside the kernel stay 128-aligned.
    if HW_pad != HW:
        x3 = jnp.pad(x_nchw.reshape(B, C, HW), ((0, 0), (0, 0), (0, HW_pad - HW)))
        x2d = x3.reshape(B, D)
    else:
        x2d = x_nchw.reshape(B, D)

    # --- batch-tile sizing from the real per-core VMEM capacity ---
    vmem_cap = _vmem_capacity_bytes()
    usable = int(vmem_cap * 0.75)
    weight_bytes = (C * FEAT_PAD * 4 + FEAT_PAD * 4            # wp, bp (f32)
                    + FEAT_PAD * HID_FUSED * 2 + HID_FUSED * 4  # w1 (bf16), b1
                    + HID_FUSED * OUT_PAD * 2 + OUT_PAD * 4)    # w2 (bf16), b2
    fixed = 2 * weight_bytes + (4 << 20)                   # resident weights + slack
    per_row = 2 * D * 4 + 2 * OUT_PAD * 4 + 16 * 1024      # x/out dbl-buf + f32 temps
    tb_cap = max(8, min(512, max(0, usable - fixed) // per_row // 8 * 8))

    if B < 8:
        TB = B                                             # block dim == full dim
    else:
        TB = min(tb_cap, _round_up(B, 8))
        # Prefer >=2 grid steps so dimension_semantics=('parallel',) actually
        # shards across both v7x TensorCores.
        while TB > 8 and -(-B // TB) < 2:
            TB = max(8, _round_up(TB // 2, 8))
    grid = (pl.cdiv(B, TB),)                               # ragged tail handled by
                                                           # Pallas partial blocks
    chunk = min(LANE_CHUNK, HW_pad)

    vmem_needed = (2 * TB * D * 4                          # x tiles (double-buffered)
                   + 2 * TB * OUT_PAD * 4                  # out tiles
                   + 2 * weight_bytes                      # resident weights
                   + TB * 16 * 1024                        # f32 acc/feat/h temps
                   + (4 << 20))                            # headroom
    vmem_limit = int(min(vmem_cap, max(vmem_needed, 32 << 20)))

    seed_arr = jnp.array([seed], dtype=jnp.int32)
    kernel = functools.partial(mynet_kernel, training=training, drop_p=DROP_P,
                               c_in=C, hw_pad=HW_pad, chunk=chunk)

    out = pl.pallas_call(
        kernel,
        out_shape=jax.ShapeDtypeStruct((B, OUT_PAD), jnp.float32),
        grid_spec=pltpu.PrefetchScalarGridSpec(
            num_scalar_prefetch=1,
            grid=grid,
            in_specs=[
                pl.BlockSpec((TB, D), lambda i, *_: (i, 0)),                # x (f32)
                pl.BlockSpec((C, FEAT_PAD), lambda i, *_: (0, 0)),          # wp (f32)
                pl.BlockSpec((1, FEAT_PAD), lambda i, *_: (0, 0)),          # bp (f32)
                pl.BlockSpec((FEAT_PAD, HID_FUSED), lambda i, *_: (0, 0)),  # w1 (bf16)
                pl.BlockSpec((1, HID_FUSED), lambda i, *_: (0, 0)),         # b1 (f32)
                pl.BlockSpec((HID_FUSED, OUT_PAD), lambda i, *_: (0, 0)),   # w2 (bf16)
                pl.BlockSpec((1, OUT_PAD), lambda i, *_: (0, 0)),           # b2 (f32)
            ],
            out_specs=pl.BlockSpec((TB, OUT_PAD), lambda i, *_: (i, 0)),
        ),
        compiler_params=pltpu.CompilerParams(
            dimension_semantics=("parallel",),
            vmem_limit_bytes=vmem_limit),
    )(seed_arr, x2d,
      packed["wp"], packed["bp"],
      packed["w1"], packed["b1"],
      packed["w2"], packed["b2"])

    c1 = out[:, :CLASS_1]
    c2 = out[:, CLASS_1:CLASS_1 + CLASS_2]
    return c1, c2


def init_params(key, c_in):
    """Deterministic synthetic parameters in the module's original layout."""
    ks = jax.random.split(key, 10)

    def lin(k, fan_in, fan_out):
        bound = 1.0 / np.sqrt(fan_in)
        return jax.random.uniform(k, (fan_in, fan_out), jnp.float32,
                                  -bound, bound)

    return {
        # backbone stand-in projection (C -> 1000)
        "wp":  lin(ks[0], c_in, FEAT_DIM),
        "bp":  jnp.zeros((1, FEAT_DIM), jnp.float32),
        # classfiler1: Linear(1000, 256), Linear(256, 4)
        "w1a": lin(ks[1], FEAT_DIM, HID_DIM),
        "b1a": jax.random.uniform(ks[2], (1, HID_DIM), jnp.float32, -0.03, 0.03),
        "w2a": lin(ks[3], HID_DIM, CLASS_1),
        "b2a": jax.random.uniform(ks[4], (1, CLASS_1), jnp.float32, -0.06, 0.06),
        # classfiler2: Linear(1000, 256), Linear(256, 3)
        "w1b": lin(ks[5], FEAT_DIM, HID_DIM),
        "b1b": jax.random.uniform(ks[6], (1, HID_DIM), jnp.float32, -0.03, 0.03),
        "w2b": lin(ks[7], HID_DIM, CLASS_2),
        "b2b": jax.random.uniform(ks[8], (1, CLASS_2), jnp.float32, -0.06, 0.06),
    }


def pack_params(params, h, w):
    """Pack/pad/cast params into the fused kernel layout (done once, offline)."""
    spatial = float(h * w)
    c_in = params["wp"].shape[0]

    # Fold the 1/(H*W) mean scale into wp; zero-pad FEAT 1000 -> 1024.
    # wp/bp stay f32 (tiny): no bf16 quantization of the folded scale.
    wp = jnp.zeros((c_in, FEAT_PAD), jnp.float32)
    wp = wp.at[:, :FEAT_DIM].set(params["wp"] / spatial)
    bp = jnp.zeros((1, FEAT_PAD), jnp.float32)
    bp = bp.at[:, :FEAT_DIM].set(params["bp"])

    # Fused first layer: [w1a | w1b] with zero rows for the padded features.
    w1 = jnp.zeros((FEAT_PAD, HID_FUSED), jnp.float32)
    w1 = w1.at[:FEAT_DIM, :HID_DIM].set(params["w1a"])
    w1 = w1.at[:FEAT_DIM, HID_DIM:].set(params["w1b"])
    b1 = jnp.concatenate([params["b1a"], params["b1b"]], axis=1)

    # Block-diagonal fused second layer producing a lane-padded logits slab.
    w2 = jnp.zeros((HID_FUSED, OUT_PAD), jnp.float32)
    w2 = w2.at[:HID_DIM, :CLASS_1].set(params["w2a"])
    w2 = w2.at[HID_DIM:, CLASS_1:CLASS_1 + CLASS_2].set(params["w2b"])
    b2 = jnp.zeros((1, OUT_PAD), jnp.float32)
    b2 = b2.at[:, :CLASS_1].set(params["b2a"])
    b2 = b2.at[:, CLASS_1:CLASS_1 + CLASS_2].set(params["b2b"])

    return {
        "wp": wp, "bp": bp,                                # f32
        "w1": w1.astype(jnp.bfloat16), "b1": b1,           # bf16 weights, f32 bias
        "w2": w2.astype(jnp.bfloat16), "b2": b2,
    }


def mynet_reference(x_nchw, params):
    """Pure-JAX f32 reference of the original module math (eval mode)."""
    B, C, H, W = x_nchw.shape
    pooled = jnp.mean(x_nchw.reshape(B, C, H * W), axis=-1)
    feat = jnp.maximum(pooled @ params["wp"] + params["bp"], 0.0)
    h1 = jnp.maximum(feat @ params["w1a"] + params["b1a"], 0.0)
    c1 = h1 @ params["w2a"] + params["b2a"]
    h2 = jnp.maximum(feat @ params["w1b"] + params["b1b"], 0.0)
    c2 = h2 @ params["w2b"] + params["b2b"]
    return c1, c2


if __name__ == "__main__":
    key = jax.random.PRNGKey(0)
    k_x, k_p = jax.random.split(key)

    B, C, H, W = 2, 3, 16, 16                      # NCHW, like PyTorch
    x = jax.random.normal(k_x, (B, C, H, W), jnp.float32)
    params = init_params(k_p, C)
    packed = pack_params(params, H, W)

    c1, c2 = mynet_forward(x, packed, training=False)
    jax.block_until_ready((c1, c2))

    r1, r2 = mynet_reference(x, params)
    assert c1.shape == (B, CLASS_1) and c2.shape == (B, CLASS_2)
    # Tolerance absorbs the bf16 weight quantization of the classifier matmuls.
    np.testing.assert_allclose(np.asarray(c1), np.asarray(r1), rtol=2e-2, atol=2e-3)
    np.testing.assert_allclose(np.asarray(c2), np.asarray(r2), rtol=2e-2, atol=2e-3)

    print("KERNEL_OK")
</pallas_src>

<mosaic_0001>
module attributes {stable_mosaic.version = 11 : i64} {
  func.func @mynet_kernel(%arg0: i32, %arg1: memref<1xi32, #tpu.memory_space<smem>>, %arg2: memref<2x768xf32, #tpu.memory_space<vmem>>, %arg3: memref<3x1024xf32, #tpu.memory_space<vmem>>, %arg4: memref<1x1024xf32, #tpu.memory_space<vmem>>, %arg5: memref<1024x512xbf16, #tpu.memory_space<vmem>>, %arg6: memref<1x512xf32, #tpu.memory_space<vmem>>, %arg7: memref<512x128xbf16, #tpu.memory_space<vmem>>, %arg8: memref<1x128xf32, #tpu.memory_space<vmem>>, %arg9: memref<2x128xf32, #tpu.memory_space<vmem>>) attributes {dimension_semantics = [#tpu.dimension_semantics<parallel>], iteration_bounds = array<i64: 1>, scalar_prefetch = 1 : i64, scratch_operands = 0 : i64, tpu.core_type = #tpu.core_type<tc>, window_params = [{transform_indices = @transform_0, window_bounds = array<i64: 2, 768>}, {pipeline_mode = #tpu.pipeline_mode<synchronous>, transform_indices = @transform_1, window_bounds = array<i64: 3, 1024>}, {pipeline_mode = #tpu.pipeline_mode<synchronous>, transform_indices = @transform_2, window_bounds = array<i64: 1, 1024>}, {pipeline_mode = #tpu.pipeline_mode<synchronous>, transform_indices = @transform_3, window_bounds = array<i64: 1024, 512>}, {pipeline_mode = #tpu.pipeline_mode<synchronous>, transform_indices = @transform_4, window_bounds = array<i64: 1, 512>}, {pipeline_mode = #tpu.pipeline_mode<synchronous>, transform_indices = @transform_5, window_bounds = array<i64: 512, 128>}, {pipeline_mode = #tpu.pipeline_mode<synchronous>, transform_indices = @transform_6, window_bounds = array<i64: 1, 128>}, {transform_indices = @transform_7, window_bounds = array<i64: 2, 128>}]} {
    %c0 = arith.constant 0 : index
    %c0_0 = arith.constant 0 : index
    %0 = vector.load %arg3[%c0, %c0_0] : memref<3x1024xf32, #tpu.memory_space<vmem>>, vector<3x1024xf32>
    %cst = arith.constant 0.000000e+00 : f32
    %1 = vector.broadcast %cst : f32 to vector<2x1024xf32>
    %cst_1 = arith.constant 0.000000e+00 : f32
    %2 = vector.broadcast %cst_1 : f32 to vector<2x1xf32>
    %c0_2 = arith.constant 0 : index
    %c0_3 = arith.constant 0 : index
    %3 = vector.load %arg2[%c0_2, %c0_3] : memref<2x768xf32, #tpu.memory_space<vmem>>, vector<2x256xf32>
    %cst_4 = arith.constant dense<0.000000e+00> : vector<2xf32>
    %4 = vector.multi_reduction <add>, %3, %cst_4 [1] : vector<2x256xf32> to vector<2xf32>
    %5 = vector.shape_cast %4 : vector<2xf32> to vector<2x1xf32>
    %6 = arith.addf %2, %5 : vector<2x1xf32>
    %7 = vector.extract_strided_slice %0 {offsets = [0, 0], sizes = [1, 1024], strides = [1, 1]} : vector<3x1024xf32> to vector<1x1024xf32>
    %8 = vector.broadcast %6 : vector<2x1xf32> to vector<2x1024xf32>
    %9 = vector.broadcast %7 : vector<1x1024xf32> to vector<2x1024xf32>
    %10 = arith.mulf %8, %9 : vector<2x1024xf32>
    %11 = arith.addf %1, %10 : vector<2x1024xf32>
    %cst_5 = arith.constant 0.000000e+00 : f32
    %12 = vector.broadcast %cst_5 : f32 to vector<2x1xf32>
    %c0_6 = arith.constant 0 : index
    %c256 = arith.constant 256 : index
    %13 = vector.load %arg2[%c0_6, %c256] : memref<2x768xf32, #tpu.memory_space<vmem>>, vector<2x256xf32>
    %cst_7 = arith.constant dense<0.000000e+00> : vector<2xf32>
    %14 = vector.multi_reduction <add>, %13, %cst_7 [1] : vector<2x256xf32> to vector<2xf32>
    %15 = vector.shape_cast %14 : vector<2xf32> to vector<2x1xf32>
    %16 = arith.addf %12, %15 : vector<2x1xf32>
    %17 = vector.extract_strided_slice %0 {offsets = [1, 0], sizes = [1, 1024], strides = [1, 1]} : vector<3x1024xf32> to vector<1x1024xf32>
    %18 = vector.broadcast %16 : vector<2x1xf32> to vector<2x1024xf32>
    %19 = vector.broadcast %17 : vector<1x1024xf32> to vector<2x1024xf32>
    %20 = arith.mulf %18, %19 : vector<2x1024xf32>
    %21 = arith.addf %11, %20 : vector<2x1024xf32>
    %cst_8 = arith.constant 0.000000e+00 : f32
    %22 = vector.broadcast %cst_8 : f32 to vector<2x1xf32>
    %c0_9 = arith.constant 0 : index
    %c512 = arith.constant 512 : index
    %23 = vector.load %arg2[%c0_9, %c512] : memref<2x768xf32, #tpu.memory_space<vmem>>, vector<2x256xf32>
    %cst_10 = arith.constant dense<0.000000e+00> : vector<2xf32>
    %24 = vector.multi_reduction <add>, %23, %cst_10 [1] : vector<2x256xf32> to vector<2xf32>
    %25 = vector.shape_cast %24 : vector<2xf32> to vector<2x1xf32>
    %26 = arith.addf %22, %25 : vector<2x1xf32>
    %27 = vector.extract_strided_slice %0 {offsets = [2, 0], sizes = [1, 1024], strides = [1, 1]} : vector<3x1024xf32> to vector<1x1024xf32>
    %28 = vector.broadcast %26 : vector<2x1xf32> to vector<2x1024xf32>
    %29 = vector.broadcast %27 : vector<1x1024xf32> to vector<2x1024xf32>
    %30 = arith.mulf %28, %29 : vector<2x1024xf32>
    %31 = arith.addf %21, %30 : vector<2x1024xf32>
    %c0_11 = arith.constant 0 : index
    %c0_12 = arith.constant 0 : index
    %32 = vector.load %arg4[%c0_11, %c0_12] : memref<1x1024xf32, #tpu.memory_space<vmem>>, vector<1x1024xf32>
    %33 = vector.broadcast %32 : vector<1x1024xf32> to vector<2x1024xf32>
    %34 = arith.addf %31, %33 : vector<2x1024xf32>
    %cst_13 = arith.constant 0.000000e+00 : f32
    %35 = vector.broadcast %cst_13 : f32 to vector<2x1024xf32>
    %36 = arith.maximumf %34, %35 : vector<2x1024xf32>
    %37 = arith.truncf %36 : vector<2x1024xf32> to vector<2x1024xbf16>
    %c0_14 = arith.constant 0 : index
    %c0_15 = arith.constant 0 : index
    %38 = vector.load %arg5[%c0_14, %c0_15] : memref<1024x512xbf16, #tpu.memory_space<vmem>>, vector<1024x512xbf16>
    %cst_16 = arith.constant dense<0.000000e+00> : vector<2x512xf32>
    %39 = tpu.matmul %37, %38, %cst_16 {dimension_numbers = #tpu.dot_dimension_numbers<[1], [0], [0], [1], [0, 0, 1, 1], [], []>} : vector<2x1024xbf16>, vector<1024x512xbf16>, vector<2x512xf32> -> vector<2x512xf32>
    %c0_17 = arith.constant 0 : index
    %c0_18 = arith.constant 0 : index
    %40 = vector.load %arg6[%c0_17, %c0_18] : memref<1x512xf32, #tpu.memory_space<vmem>>, vector<1x512xf32>
    %41 = vector.broadcast %40 : vector<1x512xf32> to vector<2x512xf32>
    %42 = arith.addf %39, %41 : vector<2x512xf32>
    %cst_19 = arith.constant 0.000000e+00 : f32
    %43 = vector.broadcast %cst_19 : f32 to vector<2x512xf32>
    %44 = arith.maximumf %42, %43 : vector<2x512xf32>
    %45 = arith.truncf %44 : vector<2x512xf32> to vector<2x512xbf16>
    %c0_20 = arith.constant 0 : index
    %c0_21 = arith.constant 0 : index
    %46 = vector.load %arg7[%c0_20, %c0_21] : memref<512x128xbf16, #tpu.memory_space<vmem>>, vector<512x128xbf16>
    %cst_22 = arith.constant dense<0.000000e+00> : vector<2x128xf32>
    %47 = tpu.matmul %45, %46, %cst_22 {dimension_numbers = #tpu.dot_dimension_numbers<[1], [0], [0], [1], [0, 0, 1, 1], [], []>} : vector<2x512xbf16>, vector<512x128xbf16>, vector<2x128xf32> -> vector<2x128xf32>
    %c0_23 = arith.constant 0 : index
    %c0_24 = arith.constant 0 : index
    %48 = vector.load %arg8[%c0_23, %c0_24] : memref<1x128xf32, #tpu.memory_space<vmem>>, vector<1x128xf32>
    %49 = vector.broadcast %48 : vector<1x128xf32> to vector<2x128xf32>
    %50 = arith.addf %47, %49 : vector<2x128xf32>
    %c0_25 = arith.constant 0 : index
    %c0_26 = arith.constant 0 : index
    %51 = vector.load %arg9[%c0_25, %c0_26] : memref<2x128xf32, #tpu.memory_space<vmem>>, vector<2x128xf32>
    tpu.vector_store %arg9[%c0_25, %c0_26], %50 {strides = array<i32>} : memref<2x128xf32, #tpu.memory_space<vmem>>, vector<2x128xf32>,
    return
  }
  func.func @transform_0(%arg0: i32, %arg1: memref<1xi32, #tpu.memory_space<smem>>) -> (i32, i32) {
    %c0_i32 = arith.constant 0 : i32
    %c0_i32_0 = arith.constant 0 : i32
    return %arg0, %c0_i32 : i32, i32
  }
  func.func @transform_1(%arg0: i32, %arg1: memref<1xi32, #tpu.memory_space<smem>>) -> (i32, i32) {
    %c0_i32 = arith.constant 0 : i32
    %c0_i32_0 = arith.constant 0 : i32
    %c0_i32_1 = arith.constant 0 : i32
    return %c0_i32, %c0_i32_0 : i32, i32
  }
  func.func @transform_2(%arg0: i32, %arg1: memref<1xi32, #tpu.memory_space<smem>>) -> (i32, i32) {
    %c0_i32 = arith.constant 0 : i32
    %c0_i32_0 = arith.constant 0 : i32
    %c0_i32_1 = arith.constant 0 : i32
    return %c0_i32, %c0_i32_0 : i32, i32
  }
  func.func @transform_3(%arg0: i32, %arg1: memref<1xi32, #tpu.memory_space<smem>>) -> (i32, i32) {
    %c0_i32 = arith.constant 0 : i32
    %c0_i32_0 = arith.constant 0 : i32
    %c0_i32_1 = arith.constant 0 : i32
    return %c0_i32, %c0_i32_0 : i32, i32
  }
  func.func @transform_4(%arg0: i32, %arg1: memref<1xi32, #tpu.memory_space<smem>>) -> (i32, i32) {
    %c0_i32 = arith.constant 0 : i32
    %c0_i32_0 = arith.constant 0 : i32
    %c0_i32_1 = arith.constant 0 : i32
    return %c0_i32, %c0_i32_0 : i32, i32
  }
  func.func @transform_5(%arg0: i32, %arg1: memref<1xi32, #tpu.memory_space<smem>>) -> (i32, i32) {
    %c0_i32 = arith.constant 0 : i32
    %c0_i32_0 = arith.constant 0 : i32
    %c0_i32_1 = arith.constant 0 : i32
    return %c0_i32, %c0_i32_0 : i32, i32
  }
  func.func @transform_6(%arg0: i32, %arg1: memref<1xi32, #tpu.memory_space<smem>>) -> (i32, i32) {
    %c0_i32 = arith.constant 0 : i32
    %c0_i32_0 = arith.constant 0 : i32
    %c0_i32_1 = arith.constant 0 : i32
    return %c0_i32, %c0_i32_0 : i32, i32
  }
  func.func @transform_7(%arg0: i32, %arg1: memref<1xi32, #tpu.memory_space<smem>>) -> (i32, i32) {
    %c0_i32 = arith.constant 0 : i32
    %c0_i32_0 = arith.constant 0 : i32
    return %arg0, %c0_i32 : i32, i32
  }
}

</mosaic_0001>

<llo_original>
// kernel: tpu_custom_call.1
$region0: #{tpu_custom_call.1}
  #allocation0 [shape = 'u32[]', space=smem, size = 0x4, offset = 0x4, fixed_abs, tag = 'smem constant byte address 0x4 - core index']
  #allocation1 [shape = 'u32[144,128]{1,0:T(1,128)}', space=vmem, size = 0x12000, scoped, tag = 'internal scratch']
  #allocation2 [shape = 's32[1]{0}', space=sflag, size = 0x4, scoped, tag = 'scoped memory for tpu_custom_call.1']
  #allocation3 [shape = 's32[1]{0:T(128)S(6)}', space=smem, size = 0x200, scoped, tag = 'prefetched SMEM operand 0']
  %s0 = inlined_call_operand.<no memory space> [shape: s32[1], index: 0, kind: input, shape index: {}]
  %s1 = inlined_call_operand.hbm [shape: f32[2,768], index: 1, kind: input, shape index: {}]
  %s2 = inlined_call_operand.hbm [shape: f32[3,1024], index: 2, kind: input, shape index: {}]
  %s3 = inlined_call_operand.vmem [shape: f32[1,1024], index: 3, kind: input, shape index: {}]
  %s4 = inlined_call_operand.hbm [shape: bf16[1024,512], index: 4, kind: input, shape index: {}]
  %s5 = inlined_call_operand.vmem [shape: f32[1,512], index: 5, kind: input, shape index: {}]
  %s6 = inlined_call_operand.hbm [shape: bf16[512,128], index: 6, kind: input, shape index: {}]
  %s7 = inlined_call_operand.vmem [shape: f32[1,128], index: 7, kind: input, shape index: {}]
  %s8 = inlined_call_operand.hbm [shape: f32[2,128], index: 8, kind: output, shape index: {}]
  %s9 = sld [smem:[#allocation0]]
  $region54: #{tpu_custom_call.1} parent=0
    _
  %s11 = ssub.s32 1, %s9
  %s12 = scalar_select 0, %s11, %s9
  %13 = sst [smem:[#allocation3]] %s0
  $region1: #{tpu_custom_call.1} parent=0
    #allocation4 [shape = 'u8[6144]{0}', space=vmem, size = 0x1800, scoped, tag = 'input window, operand 1, single buffered']
    #allocation5 [shape = 's32[1]{0}', space=sflag, size = 0x4, scoped, tag = 'scoped memory for tpu_custom_call.1']
    #allocation6 [shape = 's32[1]{0}', space=sflag, size = 0x4, scoped, tag = 'scoped memory for tpu_custom_call.1']
    #allocation7 [shape = 'u8[16384]{0}', space=vmem, size = 0x4000, scoped, tag = 'input window, operand 2, single buffered']
    #allocation8 [shape = 's32[1]{0}', space=sflag, size = 0x4, scoped, tag = 'scoped memory for tpu_custom_call.1']
    #allocation9 [shape = 'u8[1048576]{0}', space=vmem, size = 0x100000, scoped, tag = 'input window, operand 4, single buffered']
    #allocation10 [shape = 'u8[131072]{0}', space=vmem, size = 0x20000, scoped, tag = 'input window, operand 6, single buffered']
    #allocation11 [shape = 's32[1]{0}', space=sflag, size = 0x4, scoped, tag = 'scoped memory for tpu_custom_call.1']
    #allocation12 [shape = 'u8[1024]{0}', space=vmem, size = 0x400, scoped, tag = 'output window, operand 0, single buffered']
    %14 = vsyncpa [#allocation5], 0
    %15 = vsyncpa [#allocation8], 0
    %16 = vsyncpa [#allocation11], 0
    %17 = vsyncpa [#allocation6], 0
    // Predicated region
    $region2: #{tpu_custom_call.1} parent=1 // pred_check
      _
    $region3: #{tpu_custom_call.1} parent=1 // pred_check_branch
      %19 = sbr.rel (0) target = $region5
    $region4: #{tpu_custom_call.1} parent=1 // pred_region
      %s21 = ssub.s32 192, 192
      %22 = vsyncadd [#allocation5], %s21
      %s24 = sshll.u32 [#allocation4], 4
      %s25 = int_to_ptr.vmem [resolvable:$true] %s24
      %27 = dma.hbm_to_vmem [thread:$0]  %s1, 192, %s25, [#allocation5]
    $region5: #{tpu_custom_call.1} parent=1 // pred_fallthru
      _
    // Predicated region
    $region6: #{tpu_custom_call.1} parent=1 // pred_check
      _
    $region7: #{tpu_custom_call.1} parent=1 // pred_check_branch
      %29 = sbr.rel (0) target = $region9
    $region8: #{tpu_custom_call.1} parent=1 // pred_region
      %s31 = ssub.s32 512, 512
      %32 = vsyncadd [#allocation8], %s31
      %s34 = sshll.u32 [#allocation7], 4
      %s35 = int_to_ptr.vmem [resolvable:$true] %s34
      %37 = dma.hbm_to_vmem [thread:$0]  %s2, 512, %s35, [#allocation8]
    $region9: #{tpu_custom_call.1} parent=1 // pred_fallthru
      _
    // Predicated region
    $region10: #{tpu_custom_call.1} parent=1 // pred_check
      _
    $region11: #{tpu_custom_call.1} parent=1 // pred_check_branch
      %39 = sbr.rel (0) target = $region13
    $region12: #{tpu_custom_call.1} parent=1 // pred_region
      _
    $region13: #{tpu_custom_call.1} parent=1 // pred_fallthru
      _
    // Predicated region
    $region14: #{tpu_custom_call.1} parent=1 // pred_check
      _
    $region15: #{tpu_custom_call.1} parent=1 // pred_check_branch
      %41 = sbr.rel (0) target = $region17
    $region16: #{tpu_custom_call.1} parent=1 // pred_region
      %s43 = ssub.s32 32768, 32768
      %44 = vsyncadd [#allocation8], %s43
      %s45 = sshll.u32 [#allocation9], 4
      %s46 = int_to_ptr.vmem [resolvable:$true] %s45
      %51 = dma.hbm_to_vmem [thread:$0]  %s4, 32768, %s46, [#allocation8], 256, 256, 16
    $region17: #{tpu_custom_call.1} parent=1 // pred_fallthru
      _
    // Predicated region
    $region18: #{tpu_custom_call.1} parent=1 // pred_check
      _
    $region19: #{tpu_custom_call.1} parent=1 // pred_check_branch
      %53 = sbr.rel (0) target = $region21
    $region20: #{tpu_custom_call.1} parent=1 // pred_region
      _
    $region21: #{tpu_custom_call.1} parent=1 // pred_fallthru
      _
    // Predicated region
    $region22: #{tpu_custom_call.1} parent=1 // pred_check
      _
    $region23: #{tpu_custom_call.1} parent=1 // pred_check_branch
      %55 = sbr.rel (0) target = $region25
    $region24: #{tpu_custom_call.1} parent=1 // pred_region
      %s57 = ssub.s32 4096, 4096
      %58 = vsyncadd [#allocation11], %s57
      %s59 = sshll.u32 [#allocation10], 4
      %s60 = int_to_ptr.vmem [resolvable:$true] %s59
      %65 = dma.hbm_to_vmem [thread:$0]  %s6, 4096, %s60, [#allocation11], 64, 64, 4
    $region25: #{tpu_custom_call.1} parent=1 // pred_fallthru
      _
    // Predicated region
    $region26: #{tpu_custom_call.1} parent=1 // pred_check
      _
    $region27: #{tpu_custom_call.1} parent=1 // pred_check_branch
      %67 = sbr.rel (0) target = $region29
    $region28: #{tpu_custom_call.1} parent=1 // pred_region
      _
    $region29: #{tpu_custom_call.1} parent=1 // pred_fallthru
      _
    // Predicated region
    $region30: #{tpu_custom_call.1} parent=1 // pred_check
      _
    $region31: #{tpu_custom_call.1} parent=1 // pred_check_branch
      %69 = sbr.rel (0) target = $region33
    $region32: #{tpu_custom_call.1} parent=1 // pred_region
      %70 = dma.done [#allocation5], 192
    $region33: #{tpu_custom_call.1} parent=1 // pred_fallthru
      _
    // Predicated region
    $region34: #{tpu_custom_call.1} parent=1 // pred_check
      _
    $region35: #{tpu_custom_call.1} parent=1 // pred_check_branch
      %72 = sbr.rel (0) target = $region37
    $region36: #{tpu_custom_call.1} parent=1 // pred_region
      %73 = dma.done [#allocation8], 512
    $region37: #{tpu_custom_call.1} parent=1 // pred_fallthru
      _
    // Predicated region
    $region38: #{tpu_custom_call.1} parent=1 // pred_check
      _
    $region39: #{tpu_custom_call.1} parent=1 // pred_check_branch
      %75 = sbr.rel (0) target = $region41
    $region40: #{tpu_custom_call.1} parent=1 // pred_region
      %76 = dma.done [#allocation8], 32768
    $region41: #{tpu_custom_call.1} parent=1 // pred_fallthru
      _
    // Predicated region
    $region42: #{tpu_custom_call.1} parent=1 // pred_check
      _
    $region43: #{tpu_custom_call.1} parent=1 // pred_check_branch
      %78 = sbr.rel (0) target = $region45
    $region44: #{tpu_custom_call.1} parent=1 // pred_region
      %79 = dma.done [#allocation11], 4096
    $region45: #{tpu_custom_call.1} parent=1 // pred_fallthru
      _
    %v81 = vld [vmem:[#allocation7] sm:$0x77]
    %v82 = vld [vmem:[#allocation7 + $0x8] sm:$0x77]
    %v83 = vld [vmem:[#allocation7 + $0x10] sm:$0x77]
    %v84 = vld [vmem:[#allocation7 + $0x18] sm:$0x77]
    %v85 = vld [vmem:[#allocation4] sm:$0xf]
    %v88 = vunpack.c.l.s4 1983009808
    %v89 = vunpack.c.0.s8 %v88
    %v90 = vlaneseq
    %v91 = vshrl.u32 %v90, 7
    %v92 = vsub.s32 %v89, %v91
    %v93 = vrot.slane %v85, %v92
    %v94 = vcombine.high %v93, %v93
    %vm97 = vcmask 1041408
    %v98 = vsel %vm97, %v93, 0.0
    %v99 = vsel %vm97, %v94, 0.0
    %v100 = vadd.f32 %v98, %v99
    %101 = vadd.xlane.f32.xlu0 %v100
    %v102 = vpop.xlane.xlu0 %101
    %v103 = vadd.f32 %v102, 0.0
    %v108 = vlaneseq
    %v109 = vshrl.u32 %v108, 7
    %v110 = vsub.s32 0, %v109
    %v111 = vrot.slane %v81, %v110
    %v112 = vlaneseq
    %v113 = vshrl.u32 %v112, 7
    %v114 = vsub.s32 4, %v113
    %v115 = vrot.slane %v81, %v114
    %v116 = vlaneseq
    %v117 = vshrl.u32 %v116, 7
    %v118 = vsub.s32 0, %v117
    %v119 = vrot.slane %v82, %v118
    %v120 = vlaneseq
    %v121 = vshrl.u32 %v120, 7
    %v122 = vsub.s32 4, %v121
    %v123 = vrot.slane %v82, %v122
    %v124 = vlaneseq
    %v125 = vshrl.u32 %v124, 7
    %v126 = vsub.s32 0, %v125
    %v127 = vrot.slane %v83, %v126
    %v128 = vlaneseq
    %v129 = vshrl.u32 %v128, 7
    %v130 = vsub.s32 4, %v129
    %v131 = vrot.slane %v83, %v130
    %v132 = vlaneseq
    %v133 = vshrl.u32 %v132, 7
    %v134 = vsub.s32 0, %v133
    %v135 = vrot.slane %v84, %v134
    %v136 = vlaneseq
    %v137 = vshrl.u32 %v136, 7
    %v138 = vsub.s32 4, %v137
    %v139 = vrot.slane %v84, %v138
    %v148 = vlaneseq
    %v149 = vshrl.u32 %v148, 7
    %v150 = vsub.s32 0, %v149
    %v151 = vrot.slane %v111, %v150
    %v152 = vlaneseq
    %v153 = vshrl.u32 %v152, 7
    %v154 = vsub.s32 0, %v153
    %v155 = vrot.slane %v115, %v154
    %v156 = vlaneseq
    %v157 = vshrl.u32 %v156, 7
    %v158 = vsub.s32 0, %v157
    %v159 = vrot.slane %v119, %v158
    %v160 = vlaneseq
    %v161 = vshrl.u32 %v160, 7
    %v162 = vsub.s32 0, %v161
    %v163 = vrot.slane %v123, %v162
    %v164 = vlaneseq
    %v165 = vshrl.u32 %v164, 7
    %v166 = vsub.s32 0, %v165
    %v167 = vrot.slane %v127, %v166
    %v168 = vlaneseq
    %v169 = vshrl.u32 %v168, 7
    %v170 = vsub.s32 0, %v169
    %v171 = vrot.slane %v131, %v170
    %v172 = vlaneseq
    %v173 = vshrl.u32 %v172, 7
    %v174 = vsub.s32 0, %v173
    %v175 = vrot.slane %v135, %v174
    %v176 = vlaneseq
    %v177 = vshrl.u32 %v176, 7
    %v178 = vsub.s32 0, %v177
    %v179 = vrot.slane %v139, %v178
    %v180 = vmul.f32 %v103, %v151
    %v181 = vmul.f32 %v103, %v155
    %v182 = vmul.f32 %v103, %v159
    %v183 = vmul.f32 %v103, %v163
    %v184 = vmul.f32 %v103, %v167
    %v185 = vmul.f32 %v103, %v171
    %v186 = vmul.f32 %v103, %v175
    %v187 = vmul.f32 %v103, %v179
    %v188 = vadd.f32 %v180, 0.0
    %v189 = vadd.f32 %v181, 0.0
    %v190 = vadd.f32 %v182, 0.0
    %v191 = vadd.f32 %v183, 0.0
    %v192 = vadd.f32 %v184, 0.0
    %v193 = vadd.f32 %v185, 0.0
    %v194 = vadd.f32 %v186, 0.0
    %v195 = vadd.f32 %v187, 0.0
    %v196 = vld [vmem:[#allocation4 + $0x4] sm:$0xf]
    %v199 = vunpack.c.l.s4 1983009808
    %v200 = vunpack.c.0.s8 %v199
    %v201 = vlaneseq
    %v202 = vshrl.u32 %v201, 7
    %v203 = vsub.s32 %v200, %v202
    %v204 = vrot.slane %v196, %v203
    %v205 = vcombine.high %v204, %v204
    %v208 = vsel %vm97, %v204, 0.0
    %v209 = vsel %vm97, %v205, 0.0
    %v210 = vadd.f32 %v208, %v209
    %211 = vadd.xlane.f32.xlu0 %v210
    %v212 = vpop.xlane.xlu0 %211
    %v213 = vadd.f32 %v212, 0.0
    %v214 = vlaneseq
    %v215 = vshrl.u32 %v214, 7
    %v216 = vsub.s32 1, %v215
    %v217 = vrot.slane %v81, %v216
    %v218 = vlaneseq
    %v219 = vshrl.u32 %v218, 7
    %v220 = vsub.s32 5, %v219
    %v221 = vrot.slane %v81, %v220
    %v222 = vlaneseq
    %v223 = vshrl.u32 %v222, 7
    %v224 = vsub.s32 1, %v223
    %v225 = vrot.slane %v82, %v224
    %v226 = vlaneseq
    %v227 = vshrl.u32 %v226, 7
    %v228 = vsub.s32 5, %v227
    %v229 = vrot.slane %v82, %v228
    %v230 = vlaneseq
    %v231 = vshrl.u32 %v230, 7
    %v232 = vsub.s32 1, %v231
    %v233 = vrot.slane %v83, %v232
    %v234 = vlaneseq
    %v235 = vshrl.u32 %v234, 7
    %v236 = vsub.s32 5, %v235
    %v237 = vrot.slane %v83, %v236
    %v238 = vlaneseq
    %v239 = vshrl.u32 %v238, 7
    %v240 = vsub.s32 1, %v239
    %v241 = vrot.slane %v84, %v240
    %v242 = vlaneseq
    %v243 = vshrl.u32 %v242, 7
    %v244 = vsub.s32 5, %v243
    %v245 = vrot.slane %v84, %v244
    %v254 = vlaneseq
    %v255 = vshrl.u32 %v254, 7
    %v256 = vsub.s32 1, %v255
    %v257 = vrot.slane %v217, %v256
    %v258 = vlaneseq
    %v259 = vshrl.u32 %v258, 7
    %v260 = vsub.s32 1, %v259
    %v261 = vrot.slane %v221, %v260
    %v262 = vlaneseq
    %v263 = vshrl.u32 %v262, 7
    %v264 = vsub.s32 1, %v263
    %v265 = vrot.slane %v225, %v264
    %v266 = vlaneseq
    %v267 = vshrl.u32 %v266, 7
    %v268 = vsub.s32 1, %v267
    %v269 = vrot.slane %v229, %v268
    %v270 = vlaneseq
    %v271 = vshrl.u32 %v270, 7
    %v272 = vsub.s32 1, %v271
    %v273 = vrot.slane %v233, %v272
    %v274 = vlaneseq
    %v275 = vshrl.u32 %v274, 7
    %v276 = vsub.s32 1, %v275
    %v277 = vrot.slane %v237, %v276
    %v278 = vlaneseq
    %v279 = vshrl.u32 %v278, 7
    %v280 = vsub.s32 1, %v279
    %v281 = vrot.slane %v241, %v280
    %v282 = vlaneseq
    %v283 = vshrl.u32 %v282, 7
    %v284 = vsub.s32 1, %v283
    %v285 = vrot.slane %v245, %v284
    %v286 = vmul.f32 %v213, %v257
    %v287 = vmul.f32 %v213, %v261
    %v288 = vmul.f32 %v213, %v265
    %v289 = vmul.f32 %v213, %v269
    %v290 = vmul.f32 %v213, %v273
    %v291 = vmul.f32 %v213, %v277
    %v292 = vmul.f32 %v213, %v281
    %v293 = vmul.f32 %v213, %v285
    %v294 = vadd.f32 %v188, %v286
    %v295 = vadd.f32 %v189, %v287
    %v296 = vadd.f32 %v190, %v288
    %v297 = vadd.f32 %v191, %v289
    %v298 = vadd.f32 %v192, %v290
    %v299 = vadd.f32 %v193, %v291
    %v300 = vadd.f32 %v194, %v292
    %v301 = vadd.f32 %v195, %v293
    %v302 = vld [vmem:[#allocation4 + $0x8] sm:$0xf]
    %v305 = vunpack.c.l.s4 1983009808
    %v306 = vunpack.c.0.s8 %v305
    %v307 = vlaneseq
    %v308 = vshrl.u32 %v307, 7
    %v309 = vsub.s32 %v306, %v308
    %v310 = vrot.slane %v302, %v309
    %v311 = vcombine.high %v310, %v310
    %v314 = vsel %vm97, %v310, 0.0
    %v315 = vsel %vm97, %v311, 0.0
    %v316 = vadd.f32 %v314, %v315
    %317 = vadd.xlane.f32.xlu0 %v316
    %v318 = vpop.xlane.xlu0 %317
    %v319 = vadd.f32 %v318, 0.0
    %v320 = vlaneseq
    %v321 = vshrl.u32 %v320, 7
    %v322 = vsub.s32 2, %v321
    %v323 = vrot.slane %v81, %v322
    %v324 = vlaneseq
    %v325 = vshrl.u32 %v324, 7
    %v326 = vsub.s32 6, %v325
    %v327 = vrot.slane %v81, %v326
    %v328 = vlaneseq
    %v329 = vshrl.u32 %v328, 7
    %v330 = vsub.s32 2, %v329
    %v331 = vrot.slane %v82, %v330
    %v332 = vlaneseq
    %v333 = vshrl.u32 %v332, 7
    %v334 = vsub.s32 6, %v333
    %v335 = vrot.slane %v82, %v334
    %v336 = vlaneseq
    %v337 = vshrl.u32 %v336, 7
    %v338 = vsub.s32 2, %v337
    %v339 = vrot.slane %v83, %v338
    %v340 = vlaneseq
    %v341 = vshrl.u32 %v340, 7
    %v342 = vsub.s32 6, %v341
    %v343 = vrot.slane %v83, %v342
    %v344 = vlaneseq
    %v345 = vshrl.u32 %v344, 7
    %v346 = vsub.s32 2, %v345
    %v347 = vrot.slane %v84, %v346
    %v348 = vlaneseq
    %v349 = vshrl.u32 %v348, 7
    %v350 = vsub.s32 6, %v349
    %v351 = vrot.slane %v84, %v350
    %v360 = vlaneseq
    %v361 = vshrl.u32 %v360, 7
    %v362 = vsub.s32 2, %v361
    %v363 = vrot.slane %v323, %v362
    %v364 = vlaneseq
    %v365 = vshrl.u32 %v364, 7
    %v366 = vsub.s32 2, %v365
    %v367 = vrot.slane %v327, %v366
    %v368 = vlaneseq
    %v369 = vshrl.u32 %v368, 7
    %v370 = vsub.s32 2, %v369
    %v371 = vrot.slane %v331, %v370
    %v372 = vlaneseq
    %v373 = vshrl.u32 %v372, 7
    %v374 = vsub.s32 2, %v373
    %v375 = vrot.slane %v335, %v374
    %v376 = vlaneseq
    %v377 = vshrl.u32 %v376, 7
    %v378 = vsub.s32 2, %v377
    %v379 = vrot.slane %v339, %v378
    %v380 = vlaneseq
    %v381 = vshrl.u32 %v380, 7
    %v382 = vsub.s32 2, %v381
    %v383 = vrot.slane %v343, %v382
    %v384 = vlaneseq
    %v385 = vshrl.u32 %v384, 7
    %v386 = vsub.s32 2, %v385
    %v387 = vrot.slane %v347, %v386
    %v388 = vlaneseq
    %v389 = vshrl.u32 %v388, 7
    %v390 = vsub.s32 2, %v389
    %v391 = vrot.slane %v351, %v390
    %v392 = vmul.f32 %v319, %v363
    %v393 = vmul.f32 %v319, %v367
    %v394 = vmul.f32 %v319, %v371
    %v395 = vmul.f32 %v319, %v375
    %v396 = vmul.f32 %v319, %v379
    %v397 = vmul.f32 %v319, %v383
    %v398 = vmul.f32 %v319, %v387
    %v399 = vmul.f32 %v319, %v391
    %v400 = vadd.f32 %v294, %v392
    %v401 = vadd.f32 %v295, %v393
    %v402 = vadd.f32 %v296, %v394
    %v403 = vadd.f32 %v297, %v395
    %v404 = vadd.f32 %v298, %v396
    %v405 = vadd.f32 %v299, %v397
    %v406 = vadd.f32 %v300, %v398
    %v407 = vadd.f32 %v301, %v399
    %v408 = vld [vmem:[%s3] sm:$0xff]
    %v410 = vlaneseq
    %v411 = vshrl.u32 %v410, 7
    %v412 = vsub.s32 0, %v411
    %v413 = vrot.slane %v408, %v412
    %v414 = vlaneseq
    %v415 = vshrl.u32 %v414, 7
    %v416 = vsub.s32 1, %v415
    %v417 = vrot.slane %v408, %v416
    %v418 = vlaneseq
    %v419 = vshrl.u32 %v418, 7
    %v420 = vsub.s32 2, %v419
    %v421 = vrot.slane %v408, %v420
    %v422 = vlaneseq
    %v423 = vshrl.u32 %v422, 7
    %v424 = vsub.s32 3, %v423
    %v425 = vrot.slane %v408, %v424
    %v426 = vlaneseq
    %v427 = vshrl.u32 %v426, 7
    %v428 = vsub.s32 4, %v427
    %v429 = vrot.slane %v408, %v428
    %v430 = vlaneseq
    %v431 = vshrl.u32 %v430, 7
    %v432 = vsub.s32 5, %v431
    %v433 = vrot.slane %v408, %v432
    %v434 = vlaneseq
    %v435 = vshrl.u32 %v434, 7
    %v436 = vsub.s32 6, %v435
    %v437 = vrot.slane %v408, %v436
    %v438 = vlaneseq
    %v439 = vshrl.u32 %v438, 7
    %v440 = vsub.s32 7, %v439
    %v441 = vrot.slane %v408, %v440
    %v450 = vadd.f32 %v400, %v413
    %v451 = vadd.f32 %v401, %v417
    %v452 = vadd.f32 %v402, %v421
    %v453 = vadd.f32 %v403, %v425
    %v454 = vadd.f32 %v404, %v429
    %v455 = vadd.f32 %v405, %v433
    %v456 = vadd.f32 %v406, %v437
    %v457 = vadd.f32 %v407, %v441
    %v458 = vmax.f32 %v450, 0.0
    %v459 = vmax.f32 %v451, 0.0
    %v460 = vmax.f32 %v452, 0.0
    %v461 = vmax.f32 %v453, 0.0
    %v462 = vmax.f32 %v454, 0.0
    %v463 = vmax.f32 %v455, 0.0
    %v464 = vmax.f32 %v456, 0.0
    %v465 = vmax.f32 %v457, 0.0
    %v466 = vpack.c.bf16 %v458, %v458
    %v467 = vpack.c.bf16 %v459, %v459
    %v468 = vpack.c.bf16 %v460, %v460
    %v469 = vpack.c.bf16 %v461, %v461
    %v470 = vpack.c.bf16 %v462, %v462
    %v471 = vpack.c.bf16 %v463, %v463
    %v472 = vpack.c.bf16 %v464, %v464
    %v473 = vpack.c.bf16 %v465, %v465
    %v474 = vld [vmem:[#allocation9] sm:$0xff]
    %v475 = vld [vmem:[#allocation9 + $0x8] sm:$0xff]
    %v476 = vld [vmem:[#allocation9 + $0x10] sm:$0xff]
    %v477 = vld [vmem:[#allocation9 + $0x18] sm:$0xff]
    %v478 = vld [vmem:[#allocation9 + $0x20] sm:$0xff]
    %v479 = vld [vmem:[#allocation9 + $0x28] sm:$0xff]
    %v480 = vld [vmem:[#allocation9 + $0x30] sm:$0xff]
    %v481 = vld [vmem:[#allocation9 + $0x38] sm:$0xff]
    %v482 = vld [vmem:[#allocation9 + $0x40] sm:$0xff]
    %v483 = vld [vmem:[#allocation9 + $0x48] sm:$0xff]
    %v484 = vld [vmem:[#allocation9 + $0x50] sm:$0xff]
    %v485 = vld [vmem:[#allocation9 + $0x58] sm:$0xff]
    %v486 = vld [vmem:[#allocation9 + $0x60] sm:$0xff]
    %v487 = vld [vmem:[#allocation9 + $0x68] sm:$0xff]
    %v488 = vld [vmem:[#allocation9 + $0x70] sm:$0xff]
    %v489 = vld [vmem:[#allocation9 + $0x78] sm:$0xff]
    %v490 = vld [vmem:[#allocation9 + $0x80] sm:$0xff]
    %v491 = vld [vmem:[#allocation9 + $0x88] sm:$0xff]
    %v492 = vld [vmem:[#allocation9 + $0x90] sm:$0xff]
    %v493 = vld [vmem:[#allocation9 + $0x98] sm:$0xff]
    %v494 = vld [vmem:[#allocation9 + $0xa0] sm:$0xff]
    %v495 = vld [vmem:[#allocation9 + $0xa8] sm:$0xff]
    %v496 = vld [vmem:[#allocation9 + $0xb0] sm:$0xff]
    %v497 = vld [vmem:[#allocation9 + $0xb8] sm:$0xff]
    %v498 = vld [vmem:[#allocation9 + $0xc0] sm:$0xff]
    %v499 = vld [vmem:[#allocation9 + $0xc8] sm:$0xff]
    %v500 = vld [vmem:[#allocation9 + $0xd0] sm:$0xff]
    %v501 = vld [vmem:[#allocation9 + $0xd8] sm:$0xff]
    %v502 = vld [vmem:[#allocation9 + $0xe0] sm:$0xff]
    %v503 = vld [vmem:[#allocation9 + $0xe8] sm:$0xff]
    %v504 = vld [vmem:[#allocation9 + $0xf0] sm:$0xff]
    %v505 = vld [vmem:[#allocation9 + $0xf8] sm:$0xff]
    %v506 = vld [vmem:[#allocation9 + $0x100] sm:$0xff]
    %v507 = vld [vmem:[#allocation9 + $0x108] sm:$0xff]
    %v508 = vld [vmem:[#allocation9 + $0x110] sm:$0xff]
    %v509 = vld [vmem:[#allocation9 + $0x118] sm:$0xff]
    %v510 = vld [vmem:[#allocation9 + $0x120] sm:$0xff]
    %v511 = vld [vmem:[#allocation9 + $0x128] sm:$0xff]
    %v512 = vld [vmem:[#allocation9 + $0x130] sm:$0xff]
    %v513 = vld [vmem:[#allocation9 + $0x138] sm:$0xff]
    %v514 = vld [vmem:[#allocation9 + $0x140] sm:$0xff]
    %v515 = vld [vmem:[#allocation9 + $0x148] sm:$0xff]
    %v516 = vld [vmem:[#allocation9 + $0x150] sm:$0xff]
    %v517 = vld [vmem:[#allocation9 + $0x158] sm:$0xff]
    %v518 = vld [vmem:[#allocation9 + $0x160] sm:$0xff]
    %v519 = vld [vmem:[#allocation9 + $0x168] sm:$0xff]
    %v520 = vld [vmem:[#allocation9 + $0x170] sm:$0xff]
    %v521 = vld [vmem:[#allocation9 + $0x178] sm:$0xff]
    %v522 = vld [vmem:[#allocation9 + $0x180] sm:$0xff]
    %v523 = vld [vmem:[#allocation9 + $0x188] sm:$0xff]
    %v524 = vld [vmem:[#allocation9 + $0x190] sm:$0xff]
    %v525 = vld [vmem:[#allocation9 + $0x198] sm:$0xff]
    %v526 = vld [vmem:[#allocation9 + $0x1a0] sm:$0xff]
    %v527 = vld [vmem:[#allocation9 + $0x1a8] sm:$0xff]
    %v528 = vld [vmem:[#allocation9 + $0x1b0] sm:$0xff]
    %v529 = vld [vmem:[#allocation9 + $0x1b8] sm:$0xff]
    %v530 = vld [vmem:[#allocation9 + $0x1c0] sm:$0xff]
    %v531 = vld [vmem:[#allocation9 + $0x1c8] sm:$0xff]
    %v532 = vld [vmem:[#allocation9 + $0x1d0] sm:$0xff]
    %v533 = vld [vmem:[#allocation9 + $0x1d8] sm:$0xff]
    %v534 = vld [vmem:[#allocation9 + $0x1e0] sm:$0xff]
    %v535 = vld [vmem:[#allocation9 + $0x1e8] sm:$0xff]
    %v536 = vld [vmem:[#allocation9 + $0x1f0] sm:$0xff]
    %v537 = vld [vmem:[#allocation9 + $0x1f8] sm:$0xff]
    %v538 = vld [vmem:[#allocation9 + $0x200] sm:$0xff]
    %v539 = vld [vmem:[#allocation9 + $0x208] sm:$0xff]
    %v540 = vld [vmem:[#allocation9 + $0x210] sm:$0xff]
    %v541 = vld [vmem:[#allocation9 + $0x218] sm:$0xff]
    %v542 = vld [vmem:[#allocation9 + $0x220] sm:$0xff]
    %v543 = vld [vmem:[#allocation9 + $0x228] sm:$0xff]
    %v544 = vld [vmem:[#allocation9 + $0x230] sm:$0xff]
    %v545 = vld [vmem:[#allocation9 + $0x238] sm:$0xff]
    %v546 = vld [vmem:[#allocation9 + $0x240] sm:$0xff]
    %v547 = vld [vmem:[#allocation9 + $0x248] sm:$0xff]
    %v548 = vld [vmem:[#allocation9 + $0x250] sm:$0xff]
    %v549 = vld [vmem:[#allocation9 + $0x258] sm:$0xff]
    %v550 = vld [vmem:[#allocation9 + $0x260] sm:$0xff]
    %v551 = vld [vmem:[#allocation9 + $0x268] sm:$0xff]
    %v552 = vld [vmem:[#allocation9 + $0x270] sm:$0xff]
    %v553 = vld [vmem:[#allocation9 + $0x278] sm:$0xff]
    %v554 = vld [vmem:[#allocation9 + $0x280] sm:$0xff]
    %v555 = vld [vmem:[#allocation9 + $0x288] sm:$0xff]
    %v556 = vld [vmem:[#allocation9 + $0x290] sm:$0xff]
    %v557 = vld [vmem:[#allocation9 + $0x298] sm:$0xff]
    %v558 = vld [vmem:[#allocation9 + $0x2a0] sm:$0xff]
    %v559 = vld [vmem:[#allocation9 + $0x2a8] sm:$0xff]
    %v560 = vld [vmem:[#allocation9 + $0x2b0] sm:$0xff]
    %v561 = vld [vmem:[#allocation9 + $0x2b8] sm:$0xff]
    %v562 = vld [vmem:[#allocation9 + $0x2c0] sm:$0xff]
    %v563 = vld [vmem:[#allocation9 + $0x2c8] sm:$0xff]
    %v564 = vld [vmem:[#allocation9 + $0x2d0] sm:$0xff]
    %v565 = vld [vmem:[#allocation9 + $0x2d8] sm:$0xff]
    %v566 = vld [vmem:[#allocation9 + $0x2e0] sm:$0xff]
    %v567 = vld [vmem:[#allocation9 + $0x2e8] sm:$0xff]
    %v568 = vld [vmem:[#allocation9 + $0x2f0] sm:$0xff]
    %v569 = vld [vmem:[#allocation9 + $0x2f8] sm:$0xff]
    %v570 = vld [vmem:[#allocation9 + $0x300] sm:$0xff]
    %v571 = vld [vmem:[#allocation9 + $0x308] sm:$0xff]
    %v572 = vld [vmem:[#allocation9 + $0x310] sm:$0xff]
    %v573 = vld [vmem:[#allocation9 + $0x318] sm:$0xff]
    %v574 = vld [vmem:[#allocation9 + $0x320] sm:$0xff]
    %v575 = vld [vmem:[#allocation9 + $0x328] sm:$0xff]
    %v576 = vld [vmem:[#allocation9 + $0x330] sm:$0xff]
    %v577 = vld [vmem:[#allocation9 + $0x338] sm:$0xff]
    %v578 = vld [vmem:[#allocation9 + $0x340] sm:$0xff]
    %v579 = vld [vmem:[#allocation9 + $0x348] sm:$0xff]
    %v580 = vld [vmem:[#allocation9 + $0x350] sm:$0xff]
    %v581 = vld [vmem:[#allocation9 + $0x358] sm:$0xff]
    %v582 = vld [vmem:[#allocation9 + $0x360] sm:$0xff]
    %v583 = vld [vmem:[#allocation9 + $0x368] sm:$0xff]
    %v584 = vld [vmem:[#allocation9 + $0x370] sm:$0xff]
    %v585 = vld [vmem:[#allocation9 + $0x378] sm:$0xff]
    %v586 = vld [vmem:[#allocation9 + $0x380] sm:$0xff]
    %v587 = vld [vmem:[#allocation9 + $0x388] sm:$0xff]
    %v588 = vld [vmem:[#allocation9 + $0x390] sm:$0xff]
    %v589 = vld [vmem:[#allocation9 + $0x398] sm:$0xff]
    %v590 = vld [vmem:[#allocation9 + $0x3a0] sm:$0xff]
    %v591 = vld [vmem:[#allocation9 + $0x3a8] sm:$0xff]
    %v592 = vld [vmem:[#allocation9 + $0x3b0] sm:$0xff]
    %v593 = vld [vmem:[#allocation9 + $0x3b8] sm:$0xff]
    %v594 = vld [vmem:[#allocation9 + $0x3c0] sm:$0xff]
    %v595 = vld [vmem:[#allocation9 + $0x3c8] sm:$0xff]
    %v596 = vld [vmem:[#allocation9 + $0x3d0] sm:$0xff]
    %v597 = vld [vmem:[#allocation9 + $0x3d8] sm:$0xff]
    %v598 = vld [vmem:[#allocation9 + $0x3e0] sm:$0xff]
    %v599 = vld [vmem:[#allocation9 + $0x3e8] sm:$0xff]
    %v600 = vld [vmem:[#allocation9 + $0x3f0] sm:$0xff]
    %v601 = vld [vmem:[#allocation9 + $0x3f8] sm:$0xff]
    %v602 = vld [vmem:[#allocation9 + $0x400] sm:$0xff]
    %v603 = vld [vmem:[#allocation9 + $0x408] sm:$0xff]
    %v604 = vld [vmem:[#allocation9 + $0x410] sm:$0xff]
    %v605 = vld [vmem:[#allocation9 + $0x418] sm:$0xff]
    %v606 = vld [vmem:[#allocation9 + $0x420] sm:$0xff]
    %v607 = vld [vmem:[#allocation9 + $0x428] sm:$0xff]
    %v608 = vld [vmem:[#allocation9 + $0x430] sm:$0xff]
    %v609 = vld [vmem:[#allocation9 + $0x438] sm:$0xff]
    %v610 = vld [vmem:[#allocation9 + $0x440] sm:$0xff]
    %v611 = vld [vmem:[#allocation9 + $0x448] sm:$0xff]
    %v612 = vld [vmem:[#allocation9 + $0x450] sm:$0xff]
    %v613 = vld [vmem:[#allocation9 + $0x458] sm:$0xff]
    %v614 = vld [vmem:[#allocation9 + $0x460] sm:$0xff]
    %v615 = vld [vmem:[#allocation9 + $0x468] sm:$0xff]
    %v616 = vld [vmem:[#allocation9 + $0x470] sm:$0xff]
    %v617 = vld [vmem:[#allocation9 + $0x478] sm:$0xff]
    %v618 = vld [vmem:[#allocation9 + $0x480] sm:$0xff]
    %v619 = vld [vmem:[#allocation9 + $0x488] sm:$0xff]
    %v620 = vld [vmem:[#allocation9 + $0x490] sm:$0xff]
    %v621 = vld [vmem:[#allocation9 + $0x498] sm:$0xff]
    %v622 = vld [vmem:[#allocation9 + $0x4a0] sm:$0xff]
    %v623 = vld [vmem:[#allocation9 + $0x4a8] sm:$0xff]
    %v624 = vld [vmem:[#allocation9 + $0x4b0] sm:$0xff]
    %v625 = vld [vmem:[#allocation9 + $0x4b8] sm:$0xff]
    %v626 = vld [vmem:[#allocation9 + $0x4c0] sm:$0xff]
    %v627 = vld [vmem:[#allocation9 + $0x4c8] sm:$0xff]
    %v628 = vld [vmem:[#allocation9 + $0x4d0] sm:$0xff]
    %v629 = vld [vmem:[#allocation9 + $0x4d8] sm:$0xff]
    %v630 = vld [vmem:[#allocation9 + $0x4e0] sm:$0xff]
    %v631 = vld [vmem:[#allocation9 + $0x4e8] sm:$0xff]
    %v632 = vld [vmem:[#allocation9 + $0x4f0] sm:$0xff]
    %v633 = vld [vmem:[#allocation9 + $0x4f8] sm:$0xff]
    %v634 = vld [vmem:[#allocation9 + $0x500] sm:$0xff]
    %v635 = vld [vmem:[#allocation9 + $0x508] sm:$0xff]
    %v636 = vld [vmem:[#allocation9 + $0x510] sm:$0xff]
    %v637 = vld [vmem:[#allocation9 + $0x518] sm:$0xff]
    %v638 = vld [vmem:[#allocation9 + $0x520] sm:$0xff]
    %v639 = vld [vmem:[#allocation9 + $0x528] sm:$0xff]
    %v640 = vld [vmem:[#allocation9 + $0x530] sm:$0xff]
    %v641 = vld [vmem:[#allocation9 + $0x538] sm:$0xff]
    %v642 = vld [vmem:[#allocation9 + $0x540] sm:$0xff]
    %v643 = vld [vmem:[#allocation9 + $0x548] sm:$0xff]
    %v644 = vld [vmem:[#allocation9 + $0x550] sm:$0xff]
    %v645 = vld [vmem:[#allocation9 + $0x558] sm:$0xff]
    %v646 = vld [vmem:[#allocation9 + $0x560] sm:$0xff]
    %v647 = vld [vmem:[#allocation9 + $0x568] sm:$0xff]
    %v648 = vld [vmem:[#allocation9 + $0x570] sm:$0xff]
    %v649 = vld [vmem:[#allocation9 + $0x578] sm:$0xff]
    %v650 = vld [vmem:[#allocation9 + $0x580] sm:$0xff]
    %v651 = vld [vmem:[#allocation9 + $0x588] sm:$0xff]
    %v652 = vld [vmem:[#allocation9 + $0x590] sm:$0xff]
    %v653 = vld [vmem:[#allocation9 + $0x598] sm:$0xff]
    %v654 = vld [vmem:[#allocation9 + $0x5a0] sm:$0xff]
    %v655 = vld [vmem:[#allocation9 + $0x5a8] sm:$0xff]
    %v656 = vld [vmem:[#allocation9 + $0x5b0] sm:$0xff]
    %v657 = vld [vmem:[#allocation9 + $0x5b8] sm:$0xff]
    %v658 = vld [vmem:[#allocation9 + $0x5c0] sm:$0xff]
    %v659 = vld [vmem:[#allocation9 + $0x5c8] sm:$0xff]
    %v660 = vld [vmem:[#allocation9 + $0x5d0] sm:$0xff]
    %v661 = vld [vmem:[#allocation9 + $0x5d8] sm:$0xff]
    %v662 = vld [vmem:[#allocation9 + $0x5e0] sm:$0xff]
    %v663 = vld [vmem:[#allocation9 + $0x5e8] sm:$0xff]
    %v664 = vld [vmem:[#allocation9 + $0x5f0] sm:$0xff]
    %v665 = vld [vmem:[#allocation9 + $0x5f8] sm:$0xff]
    %v666 = vld [vmem:[#allocation9 + $0x600] sm:$0xff]
    %v667 = vld [vmem:[#allocation9 + $0x608] sm:$0xff]
    %v668 = vld [vmem:[#allocation9 + $0x610] sm:$0xff]
    %v669 = vld [vmem:[#allocation9 + $0x618] sm:$0xff]
    %v670 = vld [vmem:[#allocation9 + $0x620] sm:$0xff]
    %v671 = vld [vmem:[#allocation9 + $0x628] sm:$0xff]
    %v672 = vld [vmem:[#allocation9 + $0x630] sm:$0xff]
    %v673 = vld [vmem:[#allocation9 + $0x638] sm:$0xff]
    %v674 = vld [vmem:[#allocation9 + $0x640] sm:$0xff]
    %v675 = vld [vmem:[#allocation9 + $0x648] sm:$0xff]
    %v676 = vld [vmem:[#allocation9 + $0x650] sm:$0xff]
    %v677 = vld [vmem:[#allocation9 + $0x658] sm:$0xff]
    %v678 = vld [vmem:[#allocation9 + $0x660] sm:$0xff]
    %v679 = vld [vmem:[#allocation9 + $0x668] sm:$0xff]
    %v680 = vld [vmem:[#allocation9 + $0x670] sm:$0xff]
    %v681 = vld [vmem:[#allocation9 + $0x678] sm:$0xff]
    %v682 = vld [vmem:[#allocation9 + $0x680] sm:$0xff]
    %v683 = vld [vmem:[#allocation9 + $0x688] sm:$0xff]
    %v684 = vld [vmem:[#allocation9 + $0x690] sm:$0xff]
    %v685 = vld [vmem:[#allocation9 + $0x698] sm:$0xff]
    %v686 = vld [vmem:[#allocation9 + $0x6a0] sm:$0xff]
    %v687 = vld [vmem:[#allocation9 + $0x6a8] sm:$0xff]
    %v688 = vld [vmem:[#allocation9 + $0x6b0] sm:$0xff]
    %v689 = vld [vmem:[#allocation9 + $0x6b8] sm:$0xff]
    %v690 = vld [vmem:[#allocation9 + $0x6c0] sm:$0xff]
    %v691 = vld [vmem:[#allocation9 + $0x6c8] sm:$0xff]
    %v692 = vld [vmem:[#allocation9 + $0x6d0] sm:$0xff]
    %v693 = vld [vmem:[#allocation9 + $0x6d8] sm:$0xff]
    %v694 = vld [vmem:[#allocation9 + $0x6e0] sm:$0xff]
    %v695 = vld [vmem:[#allocation9 + $0x6e8] sm:$0xff]
    %v696 = vld [vmem:[#allocation9 + $0x6f0] sm:$0xff]
    %v697 = vld [vmem:[#allocation9 + $0x6f8] sm:$0xff]
    %v698 = vld [vmem:[#allocation9 + $0x700] sm:$0xff]
    %v699 = vld [vmem:[#allocation9 + $0x708] sm:$0xff]
    %v700 = vld [vmem:[#allocation9 + $0x710] sm:$0xff]
    %v701 = vld [vmem:[#allocation9 + $0x718] sm:$0xff]
    %v702 = vld [vmem:[#allocation9 + $0x720] sm:$0xff]
    %v703 = vld [vmem:[#allocation9 + $0x728] sm:$0xff]
    %v704 = vld [vmem:[#allocation9 + $0x730] sm:$0xff]
    %v705 = vld [vmem:[#allocation9 + $0x738] sm:$0xff]
    %v706 = vld [vmem:[#allocation9 + $0x740] sm:$0xff]
    %v707 = vld [vmem:[#allocation9 + $0x748] sm:$0xff]
    %v708 = vld [vmem:[#allocation9 + $0x750] sm:$0xff]
    %v709 = vld [vmem:[#allocation9 + $0x758] sm:$0xff]
    %v710 = vld [vmem:[#allocation9 + $0x760] sm:$0xff]
    %v711 = vld [vmem:[#allocation9 + $0x768] sm:$0xff]
    %v712 = vld [vmem:[#allocation9 + $0x770] sm:$0xff]
    %v713 = vld [vmem:[#allocation9 + $0x778] sm:$0xff]
    %v714 = vld [vmem:[#allocation9 + $0x780] sm:$0xff]
    %v715 = vld [vmem:[#allocation9 + $0x788] sm:$0xff]
    %v716 = vld [vmem:[#allocation9 + $0x790] sm:$0xff]
    %v717 = vld [vmem:[#allocation9 + $0x798] sm:$0xff]
    %v718 = vld [vmem:[#allocation9 + $0x7a0] sm:$0xff]
    %v719 = vld [vmem:[#allocation9 + $0x7a8] sm:$0xff]
    %v720 = vld [vmem:[#allocation9 + $0x7b0] sm:$0xff]
    %v721 = vld [vmem:[#allocation9 + $0x7b8] sm:$0xff]
    %v722 = vld [vmem:[#allocation9 + $0x7c0] sm:$0xff]
    %v723 = vld [vmem:[#allocation9 + $0x7c8] sm:$0xff]
    %v724 = vld [vmem:[#allocation9 + $0x7d0] sm:$0xff]
    %v725 = vld [vmem:[#allocation9 + $0x7d8] sm:$0xff]
    %v726 = vld [vmem:[#allocation9 + $0x7e0] sm:$0xff]
    %v727 = vld [vmem:[#allocation9 + $0x7e8] sm:$0xff]
    %v728 = vld [vmem:[#allocation9 + $0x7f0] sm:$0xff]
    %v729 = vld [vmem:[#allocation9 + $0x7f8] sm:$0xff]
    %v730 = vld [vmem:[%s5] sm:$0xf]
    %v732 = vlaneseq
    %v733 = vshrl.u32 %v732, 7
    %v734 = vsub.s32 0, %v733
    %v735 = vrot.slane %v730, %v734
    %v736 = vlaneseq
    %v737 = vshrl.u32 %v736, 7
    %v738 = vsub.s32 1, %v737
    %v739 = vrot.slane %v730, %v738
    %v740 = vlaneseq
    %v741 = vshrl.u32 %v740, 7
    %v742 = vsub.s32 2, %v741
    %v743 = vrot.slane %v730, %v742
    %v744 = vlaneseq
    %v745 = vshrl.u32 %v744, 7
    %v746 = vsub.s32 3, %v745
    %v747 = vrot.slane %v730, %v746
    %v1008 = vunpack.c.l.b16 %v474
    %v1009 = vunpack.c.h.b16 %v474
    %v1010 = vunpack.c.l.b16 %v475
    %v1011 = vunpack.c.h.b16 %v475
    %v1012 = vunpack.c.l.b16 %v476
    %v1013 = vunpack.c.h.b16 %v476
    %v1014 = vunpack.c.l.b16 %v477
    %v1015 = vunpack.c.h.b16 %v477
    %v1016 = vunpack.c.l.b16 %v478
    %v1017 = vunpack.c.h.b16 %v478
    %v1018 = vunpack.c.l.b16 %v479
    %v1019 = vunpack.c.h.b16 %v479
    %v1020 = vunpack.c.l.b16 %v480
    %v1021 = vunpack.c.h.b16 %v480
    %v1022 = vunpack.c.l.b16 %v481
    %v1023 = vunpack.c.h.b16 %v481
    %v1024 = vunpack.c.l.b16 %v482
    %v1025 = vunpack.c.h.b16 %v482
    %v1026 = vunpack.c.l.b16 %v483
    %v1027 = vunpack.c.h.b16 %v483
    %v1028 = vunpack.c.l.b16 %v484
    %v1029 = vunpack.c.h.b16 %v484
    %v1030 = vunpack.c.l.b16 %v485
    %v1031 = vunpack.c.h.b16 %v485
    %v1032 = vunpack.c.l.b16 %v486
    %v1033 = vunpack.c.h.b16 %v486
    %v1034 = vunpack.c.l.b16 %v487
    %v1035 = vunpack.c.h.b16 %v487
    %v1036 = vunpack.c.l.b16 %v488
    %v1037 = vunpack.c.h.b16 %v488
    %v1038 = vunpack.c.l.b16 %v489
    %v1039 = vunpack.c.h.b16 %v489
    %v1040 = vunpack.c.l.b16 %v490
    %v1041 = vunpack.c.h.b16 %v490
    %v1042 = vunpack.c.l.b16 %v491
    %v1043 = vunpack.c.h.b16 %v491
    %v1044 = vunpack.c.l.b16 %v492
    %v1045 = vunpack.c.h.b16 %v492
    %v1046 = vunpack.c.l.b16 %v493
    %v1047 = vunpack.c.h.b16 %v493
    %v1048 = vunpack.c.l.b16 %v494
    %v1049 = vunpack.c.h.b16 %v494
    %v1050 = vunpack.c.l.b16 %v495
    %v1051 = vunpack.c.h.b16 %v495
    %v1052 = vunpack.c.l.b16 %v496
    %v1053 = vunpack.c.h.b16 %v496
    %v1054 = vunpack.c.l.b16 %v497
    %v1055 = vunpack.c.h.b16 %v497
    %v1056 = vunpack.c.l.b16 %v498
    %v1057 = vunpack.c.h.b16 %v498
    %v1058 = vunpack.c.l.b16 %v499
    %v1059 = vunpack.c.h.b16 %v499
    %v1060 = vunpack.c.l.b16 %v500
    %v1061 = vunpack.c.h.b16 %v500
    %v1062 = vunpack.c.l.b16 %v501
    %v1063 = vunpack.c.h.b16 %v501
    %v1064 = vunpack.c.l.b16 %v502
    %v1065 = vunpack.c.h.b16 %v502
    %v1066 = vunpack.c.l.b16 %v503
    %v1067 = vunpack.c.h.b16 %v503
    %v1068 = vunpack.c.l.b16 %v504
    %v1069 = vunpack.c.h.b16 %v504
    %v1070 = vunpack.c.l.b16 %v505
    %v1071 = vunpack.c.h.b16 %v505
    %v1072 = vunpack.c.l.b16 %v506
    %v1073 = vunpack.c.h.b16 %v506
    %v1074 = vunpack.c.l.b16 %v507
    %v1075 = vunpack.c.h.b16 %v507
    %v1076 = vunpack.c.l.b16 %v508
    %v1077 = vunpack.c.h.b16 %v508
    %v1078 = vunpack.c.l.b16 %v509
    %v1079 = vunpack.c.h.b16 %v509
    %v1080 = vunpack.c.l.b16 %v510
    %v1081 = vunpack.c.h.b16 %v510
    %v1082 = vunpack.c.l.b16 %v511
    %v1083 = vunpack.c.h.b16 %v511
    %v1084 = vunpack.c.l.b16 %v512
    %v1085 = vunpack.c.h.b16 %v512
    %v1086 = vunpack.c.l.b16 %v513
    %v1087 = vunpack.c.h.b16 %v513
    %v1088 = vunpack.c.l.b16 %v514
    %v1089 = vunpack.c.h.b16 %v514
    %v1090 = vunpack.c.l.b16 %v515
    %v1091 = vunpack.c.h.b16 %v515
    %v1092 = vunpack.c.l.b16 %v516
    %v1093 = vunpack.c.h.b16 %v516
    %v1094 = vunpack.c.l.b16 %v517
    %v1095 = vunpack.c.h.b16 %v517
    %v1096 = vunpack.c.l.b16 %v518
    %v1097 = vunpack.c.h.b16 %v518
    %v1098 = vunpack.c.l.b16 %v519
    %v1099 = vunpack.c.h.b16 %v519
    %v1100 = vunpack.c.l.b16 %v520
    %v1101 = vunpack.c.h.b16 %v520
    %v1102 = vunpack.c.l.b16 %v521
    %v1103 = vunpack.c.h.b16 %v521
    %v1104 = vunpack.c.l.b16 %v522
    %v1105 = vunpack.c.h.b16 %v522
    %v1106 = vunpack.c.l.b16 %v523
    %v1107 = vunpack.c.h.b16 %v523
    %v1108 = vunpack.c.l.b16 %v524
    %v1109 = vunpack.c.h.b16 %v524
    %v1110 = vunpack.c.l.b16 %v525
    %v1111 = vunpack.c.h.b16 %v525
    %v1112 = vunpack.c.l.b16 %v526
    %v1113 = vunpack.c.h.b16 %v526
    %v1114 = vunpack.c.l.b16 %v527
    %v1115 = vunpack.c.h.b16 %v527
    %v1116 = vunpack.c.l.b16 %v528
    %v1117 = vunpack.c.h.b16 %v528
    %v1118 = vunpack.c.l.b16 %v529
    %v1119 = vunpack.c.h.b16 %v529
    %v1120 = vunpack.c.l.b16 %v530
    %v1121 = vunpack.c.h.b16 %v530
    %v1122 = vunpack.c.l.b16 %v531
    %v1123 = vunpack.c.h.b16 %v531
    %v1124 = vunpack.c.l.b16 %v532
    %v1125 = vunpack.c.h.b16 %v532
    %v1126 = vunpack.c.l.b16 %v533
    %v1127 = vunpack.c.h.b16 %v533
    %v1128 = vunpack.c.l.b16 %v534
    %v1129 = vunpack.c.h.b16 %v534
    %v1130 = vunpack.c.l.b16 %v535
    %v1131 = vunpack.c.h.b16 %v535
    %v1132 = vunpack.c.l.b16 %v536
    %v1133 = vunpack.c.h.b16 %v536
    %v1134 = vunpack.c.l.b16 %v537
    %v1135 = vunpack.c.h.b16 %v537
    %v1136 = vunpack.c.l.b16 %v538
    %v1137 = vunpack.c.h.b16 %v538
    %v1138 = vunpack.c.l.b16 %v539
    %v1139 = vunpack.c.h.b16 %v539
    %v1140 = vunpack.c.l.b16 %v540
    %v1141 = vunpack.c.h.b16 %v540
    %v1142 = vunpack.c.l.b16 %v541
    %v1143 = vunpack.c.h.b16 %v541
    %v1144 = vunpack.c.l.b16 %v542
    %v1145 = vunpack.c.h.b16 %v542
    %v1146 = vunpack.c.l.b16 %v543
    %v1147 = vunpack.c.h.b16 %v543
    %v1148 = vunpack.c.l.b16 %v544
    %v1149 = vunpack.c.h.b16 %v544
    %v1150 = vunpack.c.l.b16 %v545
    %v1151 = vunpack.c.h.b16 %v545
    %v1152 = vunpack.c.l.b16 %v546
    %v1153 = vunpack.c.h.b16 %v546
    %v1154 = vunpack.c.l.b16 %v547
    %v1155 = vunpack.c.h.b16 %v547
    %v1156 = vunpack.c.l.b16 %v548
    %v1157 = vunpack.c.h.b16 %v548
    %v1158 = vunpack.c.l.b16 %v549
    %v1159 = vunpack.c.h.b16 %v549
    %v1160 = vunpack.c.l.b16 %v550
    %v1161 = vunpack.c.h.b16 %v550
    %v1162 = vunpack.c.l.b16 %v551
    %v1163 = vunpack.c.h.b16 %v551
    %v1164 = vunpack.c.l.b16 %v552
    %v1165 = vunpack.c.h.b16 %v552
    %v1166 = vunpack.c.l.b16 %v553
    %v1167 = vunpack.c.h.b16 %v553
    %v1168 = vunpack.c.l.b16 %v554
    %v1169 = vunpack.c.h.b16 %v554
    %v1170 = vunpack.c.l.b16 %v555
    %v1171 = vunpack.c.h.b16 %v555
    %v1172 = vunpack.c.l.b16 %v556
    %v1173 = vunpack.c.h.b16 %v556
    %v1174 = vunpack.c.l.b16 %v557
    %v1175 = vunpack.c.h.b16 %v557
    %v1176 = vunpack.c.l.b16 %v558
    %v1177 = vunpack.c.h.b16 %v558
    %v1178 = vunpack.c.l.b16 %v559
    %v1179 = vunpack.c.h.b16 %v559
    %v1180 = vunpack.c.l.b16 %v560
    %v1181 = vunpack.c.h.b16 %v560
    %v1182 = vunpack.c.l.b16 %v561
    %v1183 = vunpack.c.h.b16 %v561
    %v1184 = vunpack.c.l.b16 %v562
    %v1185 = vunpack.c.h.b16 %v562
    %v1186 = vunpack.c.l.b16 %v563
    %v1187 = vunpack.c.h.b16 %v563
    %v1188 = vunpack.c.l.b16 %v564
    %v1189 = vunpack.c.h.b16 %v564
    %v1190 = vunpack.c.l.b16 %v565
    %v1191 = vunpack.c.h.b16 %v565
    %v1192 = vunpack.c.l.b16 %v566
    %v1193 = vunpack.c.h.b16 %v566
    %v1194 = vunpack.c.l.b16 %v567
    %v1195 = vunpack.c.h.b16 %v567
    %v1196 = vunpack.c.l.b16 %v568
    %v1197 = vunpack.c.h.b16 %v568
    %v1198 = vunpack.c.l.b16 %v569
    %v1199 = vunpack.c.h.b16 %v569
    %v1200 = vunpack.c.l.b16 %v570
    %v1201 = vunpack.c.h.b16 %v570
    %v1202 = vunpack.c.l.b16 %v571
    %v1203 = vunpack.c.h.b16 %v571
    %v1204 = vunpack.c.l.b16 %v572
    %v1205 = vunpack.c.h.b16 %v572
    %v1206 = vunpack.c.l.b16 %v573
    %v1207 = vunpack.c.h.b16 %v573
    %v1208 = vunpack.c.l.b16 %v574
    %v1209 = vunpack.c.h.b16 %v574
    %v1210 = vunpack.c.l.b16 %v575
    %v1211 = vunpack.c.h.b16 %v575
    %v1212 = vunpack.c.l.b16 %v576
    %v1213 = vunpack.c.h.b16 %v576
    %v1214 = vunpack.c.l.b16 %v577
    %v1215 = vunpack.c.h.b16 %v577
    %v1216 = vunpack.c.l.b16 %v578
    %v1217 = vunpack.c.h.b16 %v578
    %v1218 = vunpack.c.l.b16 %v579
    %v1219 = vunpack.c.h.b16 %v579
    %v1220 = vunpack.c.l.b16 %v580
    %v1221 = vunpack.c.h.b16 %v580
    %v1222 = vunpack.c.l.b16 %v581
    %v1223 = vunpack.c.h.b16 %v581
    %v1224 = vunpack.c.l.b16 %v582
    %v1225 = vunpack.c.h.b16 %v582
    %v1226 = vunpack.c.l.b16 %v583
    %v1227 = vunpack.c.h.b16 %v583
    %v1228 = vunpack.c.l.b16 %v584
    %v1229 = vunpack.c.h.b16 %v584
    %v1230 = vunpack.c.l.b16 %v585
    %v1231 = vunpack.c.h.b16 %v585
    %v1232 = vunpack.c.l.b16 %v586
    %v1233 = vunpack.c.h.b16 %v586
    %v1234 = vunpack.c.l.b16 %v587
    %v1235 = vunpack.c.h.b16 %v587
    %v1236 = vunpack.c.l.b16 %v588
    %v1237 = vunpack.c.h.b16 %v588
    %v1238 = vunpack.c.l.b16 %v589
    %v1239 = vunpack.c.h.b16 %v589
    %v1240 = vunpack.c.l.b16 %v590
    %v1241 = vunpack.c.h.b16 %v590
    %v1242 = vunpack.c.l.b16 %v591
    %v1243 = vunpack.c.h.b16 %v591
    %v1244 = vunpack.c.l.b16 %v592
    %v1245 = vunpack.c.h.b16 %v592
    %v1246 = vunpack.c.l.b16 %v593
    %v1247 = vunpack.c.h.b16 %v593
    %v1248 = vunpack.c.l.b16 %v594
    %v1249 = vunpack.c.h.b16 %v594
    %v1250 = vunpack.c.l.b16 %v595
    %v1251 = vunpack.c.h.b16 %v595
    %v1252 = vunpack.c.l.b16 %v596
    %v1253 = vunpack.c.h.b16 %v596
    %v1254 = vunpack.c.l.b16 %v597
    %v1255 = vunpack.c.h.b16 %v597
    %v1256 = vunpack.c.l.b16 %v598
    %v1257 = vunpack.c.h.b16 %v598
    %v1258 = vunpack.c.l.b16 %v599
    %v1259 = vunpack.c.h.b16 %v599
    %v1260 = vunpack.c.l.b16 %v600
    %v1261 = vunpack.c.h.b16 %v600
    %v1262 = vunpack.c.l.b16 %v601
    %v1263 = vunpack.c.h.b16 %v601
    %v1264 = vunpack.c.l.b16 %v602
    %v1265 = vunpack.c.h.b16 %v602
    %v1266 = vunpack.c.l.b16 %v603
    %v1267 = vunpack.c.h.b16 %v603
    %v1268 = vunpack.c.l.b16 %v604
    %v1269 = vunpack.c.h.b16 %v604
    %v1270 = vunpack.c.l.b16 %v605
    %v1271 = vunpack.c.h.b16 %v605
    %v1272 = vunpack.c.l.b16 %v606
    %v1273 = vunpack.c.h.b16 %v606
    %v1274 = vunpack.c.l.b16 %v607
    %v1275 = vunpack.c.h.b16 %v607
    %v1276 = vunpack.c.l.b16 %v608
    %v1277 = vunpack.c.h.b16 %v608
    %v1278 = vunpack.c.l.b16 %v609
    %v1279 = vunpack.c.h.b16 %v609
    %v1280 = vunpack.c.l.b16 %v610
    %v1281 = vunpack.c.h.b16 %v610
    %v1282 = vunpack.c.l.b16 %v611
    %v1283 = vunpack.c.h.b16 %v611
    %v1284 = vunpack.c.l.b16 %v612
    %v1285 = vunpack.c.h.b16 %v612
    %v1286 = vunpack.c.l.b16 %v613
    %v1287 = vunpack.c.h.b16 %v613
    %v1288 = vunpack.c.l.b16 %v614
    %v1289 = vunpack.c.h.b16 %v614
    %v1290 = vunpack.c.l.b16 %v615
    %v1291 = vunpack.c.h.b16 %v615
    %v1292 = vunpack.c.l.b16 %v616
    %v1293 = vunpack.c.h.b16 %v616
    %v1294 = vunpack.c.l.b16 %v617
    %v1295 = vunpack.c.h.b16 %v617
    %v1296 = vunpack.c.l.b16 %v618
    %v1297 = vunpack.c.h.b16 %v618
    %v1298 = vunpack.c.l.b16 %v619
    %v1299 = vunpack.c.h.b16 %v619
    %v1300 = vunpack.c.l.b16 %v620
    %v1301 = vunpack.c.h.b16 %v620
    %v1302 = vunpack.c.l.b16 %v621
    %v1303 = vunpack.c.h.b16 %v621
    %v1304 = vunpack.c.l.b16 %v622
    %v1305 = vunpack.c.h.b16 %v622
    %v1306 = vunpack.c.l.b16 %v623
    %v1307 = vunpack.c.h.b16 %v623
    %v1308 = vunpack.c.l.b16 %v624
    %v1309 = vunpack.c.h.b16 %v624
    %v1310 = vunpack.c.l.b16 %v625
    %v1311 = vunpack.c.h.b16 %v625
    %v1312 = vunpack.c.l.b16 %v626
    %v1313 = vunpack.c.h.b16 %v626
    %v1314 = vunpack.c.l.b16 %v627
    %v1315 = vunpack.c.h.b16 %v627
    %v1316 = vunpack.c.l.b16 %v628
    %v1317 = vunpack.c.h.b16 %v628
    %v1318 = vunpack.c.l.b16 %v629
    %v1319 = vunpack.c.h.b16 %v629
    %v1320 = vunpack.c.l.b16 %v630
    %v1321 = vunpack.c.h.b16 %v630
    %v1322 = vunpack.c.l.b16 %v631
    %v1323 = vunpack.c.h.b16 %v631
    %v1324 = vunpack.c.l.b16 %v632
    %v1325 = vunpack.c.h.b16 %v632
    %v1326 = vunpack.c.l.b16 %v633
    %v1327 = vunpack.c.h.b16 %v633
    %v1328 = vunpack.c.l.b16 %v634
    %v1329 = vunpack.c.h.b16 %v634
    %v1330 = vunpack.c.l.b16 %v635
    %v1331 = vunpack.c.h.b16 %v635
    %v1332 = vunpack.c.l.b16 %v636
    %v1333 = vunpack.c.h.b16 %v636
    %v1334 = vunpack.c.l.b16 %v637
    %v1335 = vunpack.c.h.b16 %v637
    %v1336 = vunpack.c.l.b16 %v638
    %v1337 = vunpack.c.h.b16 %v638
    %v1338 = vunpack.c.l.b16 %v639
    %v1339 = vunpack.c.h.b16 %v639
    %v1340 = vunpack.c.l.b16 %v640
    %v1341 = vunpack.c.h.b16 %v640
    %v1342 = vunpack.c.l.b16 %v641
    %v1343 = vunpack.c.h.b16 %v641
    %v1344 = vunpack.c.l.b16 %v642
    %v1345 = vunpack.c.h.b16 %v642
    %v1346 = vunpack.c.l.b16 %v643
    %v1347 = vunpack.c.h.b16 %v643
    %v1348 = vunpack.c.l.b16 %v644
    %v1349 = vunpack.c.h.b16 %v644
    %v1350 = vunpack.c.l.b16 %v645
    %v1351 = vunpack.c.h.b16 %v645
    %v1352 = vunpack.c.l.b16 %v646
    %v1353 = vunpack.c.h.b16 %v646
    %v1354 = vunpack.c.l.b16 %v647
    %v1355 = vunpack.c.h.b16 %v647
    %v1356 = vunpack.c.l.b16 %v648
    %v1357 = vunpack.c.h.b16 %v648
    %v1358 = vunpack.c.l.b16 %v649
    %v1359 = vunpack.c.h.b16 %v649
    %v1360 = vunpack.c.l.b16 %v650
    %v1361 = vunpack.c.h.b16 %v650
    %v1362 = vunpack.c.l.b16 %v651
    %v1363 = vunpack.c.h.b16 %v651
    %v1364 = vunpack.c.l.b16 %v652
    %v1365 = vunpack.c.h.b16 %v652
    %v1366 = vunpack.c.l.b16 %v653
    %v1367 = vunpack.c.h.b16 %v653
    %v1368 = vunpack.c.l.b16 %v654
    %v1369 = vunpack.c.h.b16 %v654
    %v1370 = vunpack.c.l.b16 %v655
    %v1371 = vunpack.c.h.b16 %v655
    %v1372 = vunpack.c.l.b16 %v656
    %v1373 = vunpack.c.h.b16 %v656
    %v1374 = vunpack.c.l.b16 %v657
    %v1375 = vunpack.c.h.b16 %v657
    %v1376 = vunpack.c.l.b16 %v658
    %v1377 = vunpack.c.h.b16 %v658
    %v1378 = vunpack.c.l.b16 %v659
    %v1379 = vunpack.c.h.b16 %v659
    %v1380 = vunpack.c.l.b16 %v660
    %v1381 = vunpack.c.h.b16 %v660
    %v1382 = vunpack.c.l.b16 %v661
    %v1383 = vunpack.c.h.b16 %v661
    %v1384 = vunpack.c.l.b16 %v662
    %v1385 = vunpack.c.h.b16 %v662
    %v1386 = vunpack.c.l.b16 %v663
    %v1387 = vunpack.c.h.b16 %v663
    %v1388 = vunpack.c.l.b16 %v664
    %v1389 = vunpack.c.h.b16 %v664
    %v1390 = vunpack.c.l.b16 %v665
    %v1391 = vunpack.c.h.b16 %v665
    %v1392 = vunpack.c.l.b16 %v666
    %v1393 = vunpack.c.h.b16 %v666
    %v1394 = vunpack.c.l.b16 %v667
    %v1395 = vunpack.c.h.b16 %v667
    %v1396 = vunpack.c.l.b16 %v668
    %v1397 = vunpack.c.h.b16 %v668
    %v1398 = vunpack.c.l.b16 %v669
    %v1399 = vunpack.c.h.b16 %v669
    %v1400 = vunpack.c.l.b16 %v670
    %v1401 = vunpack.c.h.b16 %v670
    %v1402 = vunpack.c.l.b16 %v671
    %v1403 = vunpack.c.h.b16 %v671
    %v1404 = vunpack.c.l.b16 %v672
    %v1405 = vunpack.c.h.b16 %v672
    %v1406 = vunpack.c.l.b16 %v673
    %v1407 = vunpack.c.h.b16 %v673
    %v1408 = vunpack.c.l.b16 %v674
    %v1409 = vunpack.c.h.b16 %v674
    %v1410 = vunpack.c.l.b16 %v675
    %v1411 = vunpack.c.h.b16 %v675
    %v1412 = vunpack.c.l.b16 %v676
    %v1413 = vunpack.c.h.b16 %v676
    %v1414 = vunpack.c.l.b16 %v677
    %v1415 = vunpack.c.h.b16 %v677
    %v1416 = vunpack.c.l.b16 %v678
    %v1417 = vunpack.c.h.b16 %v678
    %v1418 = vunpack.c.l.b16 %v679
    %v1419 = vunpack.c.h.b16 %v679
    %v1420 = vunpack.c.l.b16 %v680
    %v1421 = vunpack.c.h.b16 %v680
    %v1422 = vunpack.c.l.b16 %v681
    %v1423 = vunpack.c.h.b16 %v681
    %v1424 = vunpack.c.l.b16 %v682
    %v1425 = vunpack.c.h.b16 %v682
    %v1426 = vunpack.c.l.b16 %v683
    %v1427 = vunpack.c.h.b16 %v683
    %v1428 = vunpack.c.l.b16 %v684
    %v1429 = vunpack.c.h.b16 %v684
    %v1430 = vunpack.c.l.b16 %v685
    %v1431 = vunpack.c.h.b16 %v685
    %v1432 = vunpack.c.l.b16 %v686
    %v1433 = vunpack.c.h.b16 %v686
    %v1434 = vunpack.c.l.b16 %v687
    %v1435 = vunpack.c.h.b16 %v687
    %v1436 = vunpack.c.l.b16 %v688
    %v1437 = vunpack.c.h.b16 %v688
    %v1438 = vunpack.c.l.b16 %v689
    %v1439 = vunpack.c.h.b16 %v689
    %v1440 = vunpack.c.l.b16 %v690
    %v1441 = vunpack.c.h.b16 %v690
    %v1442 = vunpack.c.l.b16 %v691
    %v1443 = vunpack.c.h.b16 %v691
    %v1444 = vunpack.c.l.b16 %v692
    %v1445 = vunpack.c.h.b16 %v692
    %v1446 = vunpack.c.l.b16 %v693
    %v1447 = vunpack.c.h.b16 %v693
    %v1448 = vunpack.c.l.b16 %v694
    %v1449 = vunpack.c.h.b16 %v694
    %v1450 = vunpack.c.l.b16 %v695
    %v1451 = vunpack.c.h.b16 %v695
    %v1452 = vunpack.c.l.b16 %v696
    %v1453 = vunpack.c.h.b16 %v696
    %v1454 = vunpack.c.l.b16 %v697
    %v1455 = vunpack.c.h.b16 %v697
    %v1456 = vunpack.c.l.b16 %v698
    %v1457 = vunpack.c.h.b16 %v698
    %v1458 = vunpack.c.l.b16 %v699
    %v1459 = vunpack.c.h.b16 %v699
    %v1460 = vunpack.c.l.b16 %v700
    %v1461 = vunpack.c.h.b16 %v700
    %v1462 = vunpack.c.l.b16 %v701
    %v1463 = vunpack.c.h.b16 %v701
    %v1464 = vunpack.c.l.b16 %v702
    %v1465 = vunpack.c.h.b16 %v702
    %v1466 = vunpack.c.l.b16 %v703
    %v1467 = vunpack.c.h.b16 %v703
    %v1468 = vunpack.c.l.b16 %v704
    %v1469 = vunpack.c.h.b16 %v704
    %v1470 = vunpack.c.l.b16 %v705
    %v1471 = vunpack.c.h.b16 %v705
    %v1472 = vunpack.c.l.b16 %v706
    %v1473 = vunpack.c.h.b16 %v706
    %v1474 = vunpack.c.l.b16 %v707
    %v1475 = vunpack.c.h.b16 %v707
    %v1476 = vunpack.c.l.b16 %v708
    %v1477 = vunpack.c.h.b16 %v708
    %v1478 = vunpack.c.l.b16 %v709
    %v1479 = vunpack.c.h.b16 %v709
    %v1480 = vunpack.c.l.b16 %v710
    %v1481 = vunpack.c.h.b16 %v710
    %v1482 = vunpack.c.l.b16 %v711
    %v1483 = vunpack.c.h.b16 %v711
    %v1484 = vunpack.c.l.b16 %v712
    %v1485 = vunpack.c.h.b16 %v712
    %v1486 = vunpack.c.l.b16 %v713
    %v1487 = vunpack.c.h.b16 %v713
    %v1488 = vunpack.c.l.b16 %v714
    %v1489 = vunpack.c.h.b16 %v714
    %v1490 = vunpack.c.l.b16 %v715
    %v1491 = vunpack.c.h.b16 %v715
    %v1492 = vunpack.c.l.b16 %v716
    %v1493 = vunpack.c.h.b16 %v716
    %v1494 = vunpack.c.l.b16 %v717
    %v1495 = vunpack.c.h.b16 %v717
    %v1496 = vunpack.c.l.b16 %v718
    %v1497 = vunpack.c.h.b16 %v718
    %v1498 = vunpack.c.l.b16 %v719
    %v1499 = vunpack.c.h.b16 %v719
    %v1500 = vunpack.c.l.b16 %v720
    %v1501 = vunpack.c.h.b16 %v720
    %v1502 = vunpack.c.l.b16 %v721
    %v1503 = vunpack.c.h.b16 %v721
    %v1504 = vunpack.c.l.b16 %v722
    %v1505 = vunpack.c.h.b16 %v722
    %v1506 = vunpack.c.l.b16 %v723
    %v1507 = vunpack.c.h.b16 %v723
    %v1508 = vunpack.c.l.b16 %v724
    %v1509 = vunpack.c.h.b16 %v724
    %v1510 = vunpack.c.l.b16 %v725
    %v1511 = vunpack.c.h.b16 %v725
    %v1512 = vunpack.c.l.b16 %v726
    %v1513 = vunpack.c.h.b16 %v726
    %v1514 = vunpack.c.l.b16 %v727
    %v1515 = vunpack.c.h.b16 %v727
    %v1516 = vunpack.c.l.b16 %v728
    %v1517 = vunpack.c.h.b16 %v728
    %v1518 = vunpack.c.l.b16 %v729
    %v1519 = vunpack.c.h.b16 %v729
    %v1520 = vpack.c.b16 %v1012, %v1008
    %v1521 = vpack.c.b16 %v1013, %v1009
    %v1522 = vpack.c.b16 %v1014, %v1010
    %v1523 = vpack.c.b16 %v1015, %v1011
    %v1524 = vpack.c.b16 %v1020, %v1016
    %v1525 = vpack.c.b16 %v1021, %v1017
    %v1526 = vpack.c.b16 %v1022, %v1018
    %v1527 = vpack.c.b16 %v1023, %v1019
    %v1528 = vpack.c.b16 %v1028, %v1024
    %v1529 = vpack.c.b16 %v1029, %v1025
    %v1530 = vpack.c.b16 %v1030, %v1026
    %v1531 = vpack.c.b16 %v1031, %v1027
    %v1532 = vpack.c.b16 %v1036, %v1032
    %v1533 = vpack.c.b16 %v1037, %v1033
    %v1534 = vpack.c.b16 %v1038, %v1034
    %v1535 = vpack.c.b16 %v1039, %v1035
    %v1536 = vpack.c.b16 %v1044, %v1040
    %v1537 = vpack.c.b16 %v1045, %v1041
    %v1538 = vpack.c.b16 %v1046, %v1042
    %v1539 = vpack.c.b16 %v1047, %v1043
    %v1540 = vpack.c.b16 %v1052, %v1048
    %v1541 = vpack.c.b16 %v1053, %v1049
    %v1542 = vpack.c.b16 %v1054, %v1050
    %v1543 = vpack.c.b16 %v1055, %v1051
    %v1544 = vpack.c.b16 %v1060, %v1056
    %v1545 = vpack.c.b16 %v1061, %v1057
    %v1546 = vpack.c.b16 %v1062, %v1058
    %v1547 = vpack.c.b16 %v1063, %v1059
    %v1548 = vpack.c.b16 %v1068, %v1064
    %v1549 = vpack.c.b16 %v1069, %v1065
    %v1550 = vpack.c.b16 %v1070, %v1066
    %v1551 = vpack.c.b16 %v1071, %v1067
    %v1552 = vpack.c.b16 %v1076, %v1072
    %v1553 = vpack.c.b16 %v1077, %v1073
    %v1554 = vpack.c.b16 %v1078, %v1074
    %v1555 = vpack.c.b16 %v1079, %v1075
    %v1556 = vpack.c.b16 %v1084, %v1080
    %v1557 = vpack.c.b16 %v1085, %v1081
    %v1558 = vpack.c.b16 %v1086, %v1082
    %v1559 = vpack.c.b16 %v1087, %v1083
    %v1560 = vpack.c.b16 %v1092, %v1088
    %v1561 = vpack.c.b16 %v1093, %v1089
    %v1562 = vpack.c.b16 %v1094, %v1090
    %v1563 = vpack.c.b16 %v1095, %v1091
    %v1564 = vpack.c.b16 %v1100, %v1096
    %v1565 = vpack.c.b16 %v1101, %v1097
    %v1566 = vpack.c.b16 %v1102, %v1098
    %v1567 = vpack.c.b16 %v1103, %v1099
    %v1568 = vpack.c.b16 %v1108, %v1104
    %v1569 = vpack.c.b16 %v1109, %v1105
    %v1570 = vpack.c.b16 %v1110, %v1106
    %v1571 = vpack.c.b16 %v1111, %v1107
    %v1572 = vpack.c.b16 %v1116, %v1112
    %v1573 = vpack.c.b16 %v1117, %v1113
    %v1574 = vpack.c.b16 %v1118, %v1114
    %v1575 = vpack.c.b16 %v1119, %v1115
    %v1576 = vpack.c.b16 %v1124, %v1120
    %v1577 = vpack.c.b16 %v1125, %v1121
    %v1578 = vpack.c.b16 %v1126, %v1122
    %v1579 = vpack.c.b16 %v1127, %v1123
    %v1580 = vpack.c.b16 %v1132, %v1128
    %v1581 = vpack.c.b16 %v1133, %v1129
    %v1582 = vpack.c.b16 %v1134, %v1130
    %v1583 = vpack.c.b16 %v1135, %v1131
    %v1584 = vpack.c.b16 %v1140, %v1136
    %v1585 = vpack.c.b16 %v1141, %v1137
    %v1586 = vpack.c.b16 %v1142, %v1138
    %v1587 = vpack.c.b16 %v1143, %v1139
    %v1588 = vpack.c.b16 %v1148, %v1144
    %v1589 = vpack.c.b16 %v1149, %v1145
    %v1590 = vpack.c.b16 %v1150, %v1146
    %v1591 = vpack.c.b16 %v1151, %v1147
    %v1592 = vpack.c.b16 %v1156, %v1152
    %v1593 = vpack.c.b16 %v1157, %v1153
    %v1594 = vpack.c.b16 %v1158, %v1154
    %v1595 = vpack.c.b16 %v1159, %v1155
    %v1596 = vpack.c.b16 %v1164, %v1160
    %v1597 = vpack.c.b16 %v1165, %v1161
    %v1598 = vpack.c.b16 %v1166, %v1162
    %v1599 = vpack.c.b16 %v1167, %v1163
    %v1600 = vpack.c.b16 %v1172, %v1168
    %v1601 = vpack.c.b16 %v1173, %v1169
    %v1602 = vpack.c.b16 %v1174, %v1170
    %v1603 = vpack.c.b16 %v1175, %v1171
    %v1604 = vpack.c.b16 %v1180, %v1176
    %v1605 = vpack.c.b16 %v1181, %v1177
    %v1606 = vpack.c.b16 %v1182, %v1178
    %v1607 = vpack.c.b16 %v1183, %v1179
    %v1608 = vpack.c.b16 %v1188, %v1184
    %v1609 = vpack.c.b16 %v1189, %v1185
    %v1610 = vpack.c.b16 %v1190, %v1186
    %v1611 = vpack.c.b16 %v1191, %v1187
    %v1612 = vpack.c.b16 %v1196, %v1192
    %v1613 = vpack.c.b16 %v1197, %v1193
    %v1614 = vpack.c.b16 %v1198, %v1194
    %v1615 = vpack.c.b16 %v1199, %v1195
    %v1616 = vpack.c.b16 %v1204, %v1200
    %v1617 = vpack.c.b16 %v1205, %v1201
    %v1618 = vpack.c.b16 %v1206, %v1202
    %v1619 = vpack.c.b16 %v1207, %v1203
    %v1620 = vpack.c.b16 %v1212, %v1208
    %v1621 = vpack.c.b16 %v1213, %v1209
    %v1622 = vpack.c.b16 %v1214, %v1210
    %v1623 = vpack.c.b16 %v1215, %v1211
    %v1624 = vpack.c.b16 %v1220, %v1216
    %v1625 = vpack.c.b16 %v1221, %v1217
    %v1626 = vpack.c.b16 %v1222, %v1218
    %v1627 = vpack.c.b16 %v1223, %v1219
    %v1628 = vpack.c.b16 %v1228, %v1224
    %v1629 = vpack.c.b16 %v1229, %v1225
    %v1630 = vpack.c.b16 %v1230, %v1226
    %v1631 = vpack.c.b16 %v1231, %v1227
    %v1632 = vpack.c.b16 %v1236, %v1232
    %v1633 = vpack.c.b16 %v1237, %v1233
    %v1634 = vpack.c.b16 %v1238, %v1234
    %v1635 = vpack.c.b16 %v1239, %v1235
    %v1636 = vpack.c.b16 %v1244, %v1240
    %v1637 = vpack.c.b16 %v1245, %v1241
    %v1638 = vpack.c.b16 %v1246, %v1242
    %v1639 = vpack.c.b16 %v1247, %v1243
    %v1640 = vpack.c.b16 %v1252, %v1248
    %v1641 = vpack.c.b16 %v1253, %v1249
    %v1642 = vpack.c.b16 %v1254, %v1250
    %v1643 = vpack.c.b16 %v1255, %v1251
    %v1644 = vpack.c.b16 %v1260, %v1256
    %v1645 = vpack.c.b16 %v1261, %v1257
    %v1646 = vpack.c.b16 %v1262, %v1258
    %v1647 = vpack.c.b16 %v1263, %v1259
    %v1648 = vpack.c.b16 %v1268, %v1264
    %v1649 = vpack.c.b16 %v1269, %v1265
    %v1650 = vpack.c.b16 %v1270, %v1266
    %v1651 = vpack.c.b16 %v1271, %v1267
    %v1652 = vpack.c.b16 %v1276, %v1272
    %v1653 = vpack.c.b16 %v1277, %v1273
    %v1654 = vpack.c.b16 %v1278, %v1274
    %v1655 = vpack.c.b16 %v1279, %v1275
    %v1656 = vpack.c.b16 %v1284, %v1280
    %v1657 = vpack.c.b16 %v1285, %v1281
    %v1658 = vpack.c.b16 %v1286, %v1282
    %v1659 = vpack.c.b16 %v1287, %v1283
    %v1660 = vpack.c.b16 %v1292, %v1288
    %v1661 = vpack.c.b16 %v1293, %v1289
    %v1662 = vpack.c.b16 %v1294, %v1290
    %v1663 = vpack.c.b16 %v1295, %v1291
    %v1664 = vpack.c.b16 %v1300, %v1296
    %v1665 = vpack.c.b16 %v1301, %v1297
    %v1666 = vpack.c.b16 %v1302, %v1298
    %v1667 = vpack.c.b16 %v1303, %v1299
    %v1668 = vpack.c.b16 %v1308, %v1304
    %v1669 = vpack.c.b16 %v1309, %v1305
    %v1670 = vpack.c.b16 %v1310, %v1306
    %v1671 = vpack.c.b16 %v1311, %v1307
    %v1672 = vpack.c.b16 %v1316, %v1312
    %v1673 = vpack.c.b16 %v1317, %v1313
    %v1674 = vpack.c.b16 %v1318, %v1314
    %v1675 = vpack.c.b16 %v1319, %v1315
    %v1676 = vpack.c.b16 %v1324, %v1320
    %v1677 = vpack.c.b16 %v1325, %v1321
    %v1678 = vpack.c.b16 %v1326, %v1322
    %v1679 = vpack.c.b16 %v1327, %v1323
    %v1680 = vpack.c.b16 %v1332, %v1328
    %v1681 = vpack.c.b16 %v1333, %v1329
    %v1682 = vpack.c.b16 %v1334, %v1330
    %v1683 = vpack.c.b16 %v1335, %v1331
    %v1684 = vpack.c.b16 %v1340, %v1336
    %v1685 = vpack.c.b16 %v1341, %v1337
    %v1686 = vpack.c.b16 %v1342, %v1338
    %v1687 = vpack.c.b16 %v1343, %v1339
    %v1688 = vpack.c.b16 %v1348, %v1344
    %v1689 = vpack.c.b16 %v1349, %v1345
    %v1690 = vpack.c.b16 %v1350, %v1346
    %v1691 = vpack.c.b16 %v1351, %v1347
    %v1692 = vpack.c.b16 %v1356, %v1352
    %v1693 = vpack.c.b16 %v1357, %v1353
    %v1694 = vpack.c.b16 %v1358, %v1354
    %v1695 = vpack.c.b16 %v1359, %v1355
    %v1696 = vpack.c.b16 %v1364, %v1360
    %v1697 = vpack.c.b16 %v1365, %v1361
    %v1698 = vpack.c.b16 %v1366, %v1362
    %v1699 = vpack.c.b16 %v1367, %v1363
    %v1700 = vpack.c.b16 %v1372, %v1368
    %v1701 = vpack.c.b16 %v1373, %v1369
    %v1702 = vpack.c.b16 %v1374, %v1370
    %v1703 = vpack.c.b16 %v1375, %v1371
    %v1704 = vpack.c.b16 %v1380, %v1376
    %v1705 = vpack.c.b16 %v1381, %v1377
    %v1706 = vpack.c.b16 %v1382, %v1378
    %v1707 = vpack.c.b16 %v1383, %v1379
    %v1708 = vpack.c.b16 %v1388, %v1384
    %v1709 = vpack.c.b16 %v1389, %v1385
    %v1710 = vpack.c.b16 %v1390, %v1386
    %v1711 = vpack.c.b16 %v1391, %v1387
    %v1712 = vpack.c.b16 %v1396, %v1392
    %v1713 = vpack.c.b16 %v1397, %v1393
    %v1714 = vpack.c.b16 %v1398, %v1394
    %v1715 = vpack.c.b16 %v1399, %v1395
    %v1716 = vpack.c.b16 %v1404, %v1400
    %v1717 = vpack.c.b16 %v1405, %v1401
    %v1718 = vpack.c.b16 %v1406, %v1402
    %v1719 = vpack.c.b16 %v1407, %v1403
    %v1720 = vpack.c.b16 %v1412, %v1408
    %v1721 = vpack.c.b16 %v1413, %v1409
    %v1722 = vpack.c.b16 %v1414, %v1410
    %v1723 = vpack.c.b16 %v1415, %v1411
    %v1724 = vpack.c.b16 %v1420, %v1416
    %v1725 = vpack.c.b16 %v1421, %v1417
    %v1726 = vpack.c.b16 %v1422, %v1418
    %v1727 = vpack.c.b16 %v1423, %v1419
    %v1728 = vpack.c.b16 %v1428, %v1424
    %v1729 = vpack.c.b16 %v1429, %v1425
    %v1730 = vpack.c.b16 %v1430, %v1426
    %v1731 = vpack.c.b16 %v1431, %v1427
    %v1732 = vpack.c.b16 %v1436, %v1432
    %v1733 = vpack.c.b16 %v1437, %v1433
    %v1734 = vpack.c.b16 %v1438, %v1434
    %v1735 = vpack.c.b16 %v1439, %v1435
    %v1736 = vpack.c.b16 %v1444, %v1440
    %v1737 = vpack.c.b16 %v1445, %v1441
    %v1738 = vpack.c.b16 %v1446, %v1442
    %v1739 = vpack.c.b16 %v1447, %v1443
    %v1740 = vpack.c.b16 %v1452, %v1448
    %v1741 = vpack.c.b16 %v1453, %v1449
    %v1742 = vpack.c.b16 %v1454, %v1450
    %v1743 = vpack.c.b16 %v1455, %v1451
    %v1744 = vpack.c.b16 %v1460, %v1456
    %v1745 = vpack.c.b16 %v1461, %v1457
    %v1746 = vpack.c.b16 %v1462, %v1458
    %v1747 = vpack.c.b16 %v1463, %v1459
    %v1748 = vpack.c.b16 %v1468, %v1464
    %v1749 = vpack.c.b16 %v1469, %v1465
    %v1750 = vpack.c.b16 %v1470, %v1466
    %v1751 = vpack.c.b16 %v1471, %v1467
    %v1752 = vpack.c.b16 %v1476, %v1472
    %v1753 = vpack.c.b16 %v1477, %v1473
    %v1754 = vpack.c.b16 %v1478, %v1474
    %v1755 = vpack.c.b16 %v1479, %v1475
    %v1756 = vpack.c.b16 %v1484, %v1480
    %v1757 = vpack.c.b16 %v1485, %v1481
    %v1758 = vpack.c.b16 %v1486, %v1482
    %v1759 = vpack.c.b16 %v1487, %v1483
    %v1760 = vpack.c.b16 %v1492, %v1488
    %v1761 = vpack.c.b16 %v1493, %v1489
    %v1762 = vpack.c.b16 %v1494, %v1490
    %v1763 = vpack.c.b16 %v1495, %v1491
    %v1764 = vpack.c.b16 %v1500, %v1496
    %v1765 = vpack.c.b16 %v1501, %v1497
    %v1766 = vpack.c.b16 %v1502, %v1498
    %v1767 = vpack.c.b16 %v1503, %v1499
    %v1768 = vpack.c.b16 %v1508, %v1504
    %v1769 = vpack.c.b16 %v1509, %v1505
    %v1770 = vpack.c.b16 %v1510, %v1506
    %v1771 = vpack.c.b16 %v1511, %v1507
    %v1772 = vpack.c.b16 %v1516, %v1512
    %v1773 = vpack.c.b16 %v1517, %v1513
    %v1774 = vpack.c.b16 %v1518, %v1514
    %v1775 = vpack.c.b16 %v1519, %v1515
    %2032 = vmatprep.subr.bf16.mxu0 %v1521
    %2033 = vmatpush1.bf16.msra.mxu0 %v1520
    %2034 = vmatprep.subr.bf16.mxu0 %v1525
    %2035 = vmatpush1.bf16.msra.mxu0 %v1524
    %2036 = vmatprep.subr.bf16.mxu0 %v1529
    %2037 = vmatpush1.bf16.msra.mxu0 %v1528
    %2038 = vmatprep.subr.bf16.mxu0 %v1533
    %2039 = vmatpush1.bf16.msra.mxu0 %v1532
    %2040 = vmatprep.subr.bf16.mxu0 %v1537
    %2041 = vmatpush1.bf16.msra.mxu0 %v1536
    %2042 = vmatprep.subr.bf16.mxu0 %v1541
    %2043 = vmatpush1.bf16.msra.mxu0 %v1540
    %2044 = vmatprep.subr.bf16.mxu0 %v1545
    %2045 = vmatpush1.bf16.msra.mxu0 %v1544
    %2046 = vmatprep.subr.bf16.mxu0 %v1549
    %2047 = vmatpush1.bf16.msra.mxu0 %v1548
    %2048 = vmatprep.subr.bf16.mxu0 %v1553
    %2049 = vmatpush1.bf16.msra.mxu0 %v1552
    %2050 = vmatprep.subr.bf16.mxu0 %v1557
    %2051 = vmatpush1.bf16.msra.mxu0 %v1556
    %2052 = vmatprep.subr.bf16.mxu0 %v1561
    %2053 = vmatpush1.bf16.msra.mxu0 %v1560
    %2054 = vmatprep.subr.bf16.mxu0 %v1565
    %2055 = vmatpush1.bf16.msra.mxu0 %v1564
    %2056 = vmatprep.subr.bf16.mxu0 %v1569
    %2057 = vmatpush1.bf16.msra.mxu0 %v1568
    %2058 = vmatprep.subr.bf16.mxu0 %v1573
    %2059 = vmatpush1.bf16.msra.mxu0 %v1572
    %2060 = vmatprep.subr.bf16.mxu0 %v1577
    %2061 = vmatpush1.bf16.msra.mxu0 %v1576
    %2062 = vmatprep.subr.bf16.mxu0 %v1581
    %2063 = vmatpush1.bf16.msra.mxu0 %v1580
    %2064 = vmatprep.mubr.bf16.mxu0 %v467
    %2065 = vmatmul.mubr.bf16.gmra.mrb[0].mxu0 %v466
    %v2066 = vpop.f32.mrb[0].mxu0
    %v2067 = vadd.f32 %v735, %v2066
    %v2068 = vpop.f32.mrb[0].mxu0
    %v2069 = vadd.f32 %v739, %v2068
    %v2070 = vpop.f32.mrb[0].mxu0
    %v2071 = vpop.f32.mrb[0].mxu0
    %2072 = vdwg.mxu0
    %2073 = vmatprep.subr.bf16.mxu0 %v1585
    %2074 = vmatpush1.bf16.msra.mxu0 %v1584
    %2075 = vmatprep.subr.bf16.mxu0 %v1589
    %2076 = vmatpush1.bf16.msra.mxu0 %v1588
    %2077 = vmatprep.subr.bf16.mxu0 %v1593
    %2078 = vmatpush1.bf16.msra.mxu0 %v1592
    %2079 = vmatprep.subr.bf16.mxu0 %v1597
    %2080 = vmatpush1.bf16.msra.mxu0 %v1596
    %2081 = vmatprep.subr.bf16.mxu0 %v1601
    %2082 = vmatpush1.bf16.msra.mxu0 %v1600
    %2083 = vmatprep.subr.bf16.mxu0 %v1605
    %2084 = vmatpush1.bf16.msra.mxu0 %v1604
    %2085 = vmatprep.subr.bf16.mxu0 %v1609
    %2086 = vmatpush1.bf16.msra.mxu0 %v1608
    %2087 = vmatprep.subr.bf16.mxu0 %v1613
    %2088 = vmatpush1.bf16.msra.mxu0 %v1612
    %2089 = vmatprep.subr.bf16.mxu0 %v1617
    %2090 = vmatpush1.bf16.msra.mxu0 %v1616
    %2091 = vmatprep.subr.bf16.mxu0 %v1621
    %2092 = vmatpush1.bf16.msra.mxu0 %v1620
    %2093 = vmatprep.subr.bf16.mxu0 %v1625
    %2094 = vmatpush1.bf16.msra.mxu0 %v1624
    %2095 = vmatprep.subr.bf16.mxu0 %v1629
    %2096 = vmatpush1.bf16.msra.mxu0 %v1628
    %2097 = vmatprep.subr.bf16.mxu0 %v1633
    %2098 = vmatpush1.bf16.msra.mxu0 %v1632
    %2099 = vmatprep.subr.bf16.mxu0 %v1637
    %2100 = vmatpush1.bf16.msra.mxu0 %v1636
    %2101 = vmatprep.subr.bf16.mxu0 %v1641
    %2102 = vmatpush1.bf16.msra.mxu0 %v1640
    %2103 = vmatprep.subr.bf16.mxu0 %v1645
    %2104 = vmatpush1.bf16.msra.mxu0 %v1644
    %2105 = vmatprep.mubr.bf16.mxu0 %v469
    %2106 = vmatmul.mubr.bf16.gmra.mrb[0].mxu0 %v468
    %v2107 = vpop.f32.mrb[0].mxu0
    %v2108 = vadd.f32 %v2067, %v2107
    %v2109 = vpop.f32.mrb[0].mxu0
    %v2110 = vadd.f32 %v2069, %v2109
    %v2111 = vpop.f32.mrb[0].mxu0
    %v2112 = vpop.f32.mrb[0].mxu0
    %2113 = vdwg.mxu0
    %2114 = vmatprep.subr.bf16.mxu0 %v1649
    %2115 = vmatpush1.bf16.msra.mxu0 %v1648
    %2116 = vmatprep.subr.bf16.mxu0 %v1653
    %2117 = vmatpush1.bf16.msra.mxu0 %v1652
    %2118 = vmatprep.subr.bf16.mxu0 %v1657
    %2119 = vmatpush1.bf16.msra.mxu0 %v1656
    %2120 = vmatprep.subr.bf16.mxu0 %v1661
    %2121 = vmatpush1.bf16.msra.mxu0 %v1660
    %2122 = vmatprep.subr.bf16.mxu0 %v1665
    %2123 = vmatpush1.bf16.msra.mxu0 %v1664
    %2124 = vmatprep.subr.bf16.mxu0 %v1669
    %2125 = vmatpush1.bf16.msra.mxu0 %v1668
    %2126 = vmatprep.subr.bf16.mxu0 %v1673
    %2127 = vmatpush1.bf16.msra.mxu0 %v1672
    %2128 = vmatprep.subr.bf16.mxu0 %v1677
    %2129 = vmatpush1.bf16.msra.mxu0 %v1676
    %2130 = vmatprep.subr.bf16.mxu0 %v1681
    %2131 = vmatpush1.bf16.msra.mxu0 %v1680
    %2132 = vmatprep.subr.bf16.mxu0 %v1685
    %2133 = vmatpush1.bf16.msra.mxu0 %v1684
    %2134 = vmatprep.subr.bf16.mxu0 %v1689
    %2135 = vmatpush1.bf16.msra.mxu0 %v1688
    %2136 = vmatprep.subr.bf16.mxu0 %v1693
    %2137 = vmatpush1.bf16.msra.mxu0 %v1692
    %2138 = vmatprep.subr.bf16.mxu0 %v1697
    %2139 = vmatpush1.bf16.msra.mxu0 %v1696
    %2140 = vmatprep.subr.bf16.mxu0 %v1701
    %2141 = vmatpush1.bf16.msra.mxu0 %v1700
    %2142 = vmatprep.subr.bf16.mxu0 %v1705
    %2143 = vmatpush1.bf16.msra.mxu0 %v1704
    %2144 = vmatprep.subr.bf16.mxu0 %v1709
    %2145 = vmatpush1.bf16.msra.mxu0 %v1708
    %2146 = vmatprep.mubr.bf16.mxu0 %v471
    %2147 = vmatmul.mubr.bf16.gmra.mrb[0].mxu0 %v470
    %v2148 = vpop.f32.mrb[0].mxu0
    %v2149 = vadd.f32 %v2108, %v2148
    %v2150 = vpop.f32.mrb[0].mxu0
    %v2151 = vadd.f32 %v2110, %v2150
    %v2152 = vpop.f32.mrb[0].mxu0
    %v2153 = vpop.f32.mrb[0].mxu0
    %2154 = vdwg.mxu0
    %2155 = vmatprep.subr.bf16.mxu0 %v1713
    %2156 = vmatpush1.bf16.msra.mxu0 %v1712
    %2157 = vmatprep.subr.bf16.mxu0 %v1717
    %2158 = vmatpush1.bf16.msra.mxu0 %v1716
    %2159 = vmatprep.subr.bf16.mxu0 %v1721
    %2160 = vmatpush1.bf16.msra.mxu0 %v1720
    %2161 = vmatprep.subr.bf16.mxu0 %v1725
    %2162 = vmatpush1.bf16.msra.mxu0 %v1724
    %2163 = vmatprep.subr.bf16.mxu0 %v1729
    %2164 = vmatpush1.bf16.msra.mxu0 %v1728
    %2165 = vmatprep.subr.bf16.mxu0 %v1733
    %2166 = vmatpush1.bf16.msra.mxu0 %v1732
    %2167 = vmatprep.subr.bf16.mxu0 %v1737
    %2168 = vmatpush1.bf16.msra.mxu0 %v1736
    %2169 = vmatprep.subr.bf16.mxu0 %v1741
    %2170 = vmatpush1.bf16.msra.mxu0 %v1740
    %2171 = vmatprep.subr.bf16.mxu0 %v1745
    %2172 = vmatpush1.bf16.msra.mxu0 %v1744
    %2173 = vmatprep.subr.bf16.mxu0 %v1749
    %2174 = vmatpush1.bf16.msra.mxu0 %v1748
    %2175 = vmatprep.subr.bf16.mxu0 %v1753
    %2176 = vmatpush1.bf16.msra.mxu0 %v1752
    %2177 = vmatprep.subr.bf16.mxu0 %v1757
    %2178 = vmatpush1.bf16.msra.mxu0 %v1756
    %2179 = vmatprep.subr.bf16.mxu0 %v1761
    %2180 = vmatpush1.bf16.msra.mxu0 %v1760
    %2181 = vmatprep.subr.bf16.mxu0 %v1765
    %2182 = vmatpush1.bf16.msra.mxu0 %v1764
    %2183 = vmatprep.subr.bf16.mxu0 %v1769
    %2184 = vmatpush1.bf16.msra.mxu0 %v1768
    %2185 = vmatprep.subr.bf16.mxu0 %v1773
    %2186 = vmatpush1.bf16.msra.mxu0 %v1772
    %2187 = vmatprep.mubr.bf16.mxu0 %v473
    %2188 = vmatmul.mubr.bf16.gmra.mrb[0].mxu0 %v472
    %v2189 = vpop.f32.mrb[0].mxu0
    %v2190 = vadd.f32 %v2149, %v2189
    %v2191 = vpop.f32.mrb[0].mxu0
    %v2192 = vadd.f32 %v2151, %v2191
    %v2193 = vpop.f32.mrb[0].mxu0
    %v2194 = vpop.f32.mrb[0].mxu0
    %2195 = vdwg.mxu0
    %2196 = vmatprep.subr.bf16.mxu0 %v1523
    %2197 = vmatpush1.bf16.msra.mxu0 %v1522
    %2198 = vmatprep.subr.bf16.mxu0 %v1527
    %2199 = vmatpush1.bf16.msra.mxu0 %v1526
    %2200 = vmatprep.subr.bf16.mxu0 %v1531
    %2201 = vmatpush1.bf16.msra.mxu0 %v1530
    %2202 = vmatprep.subr.bf16.mxu0 %v1535
    %2203 = vmatpush1.bf16.msra.mxu0 %v1534
    %2204 = vmatprep.subr.bf16.mxu0 %v1539
    %2205 = vmatpush1.bf16.msra.mxu0 %v1538
    %2206 = vmatprep.subr.bf16.mxu0 %v1543
    %2207 = vmatpush1.bf16.msra.mxu0 %v1542
    %2208 = vmatprep.subr.bf16.mxu0 %v1547
    %2209 = vmatpush1.bf16.msra.mxu0 %v1546
    %2210 = vmatprep.subr.bf16.mxu0 %v1551
    %2211 = vmatpush1.bf16.msra.mxu0 %v1550
    %2212 = vmatprep.subr.bf16.mxu0 %v1555
    %2213 = vmatpush1.bf16.msra.mxu0 %v1554
    %2214 = vmatprep.subr.bf16.mxu0 %v1559
    %2215 = vmatpush1.bf16.msra.mxu0 %v1558
    %2216 = vmatprep.subr.bf16.mxu0 %v1563
    %2217 = vmatpush1.bf16.msra.mxu0 %v1562
    %2218 = vmatprep.subr.bf16.mxu0 %v1567
    %2219 = vmatpush1.bf16.msra.mxu0 %v1566
    %2220 = vmatprep.subr.bf16.mxu0 %v1571
    %2221 = vmatpush1.bf16.msra.mxu0 %v1570
    %2222 = vmatprep.subr.bf16.mxu0 %v1575
    %2223 = vmatpush1.bf16.msra.mxu0 %v1574
    %2224 = vmatprep.subr.bf16.mxu0 %v1579
    %2225 = vmatpush1.bf16.msra.mxu0 %v1578
    %2226 = vmatprep.subr.bf16.mxu0 %v1583
    %2227 = vmatpush1.bf16.msra.mxu0 %v1582
    %2228 = vmatprep.mubr.bf16.mxu0 %v467
    %2229 = vmatmul.mubr.bf16.gmra.mrb[0].mxu0 %v466
    %v2230 = vpop.f32.mrb[0].mxu0
    %v2231 = vadd.f32 %v743, %v2230
    %v2232 = vpop.f32.mrb[0].mxu0
    %v2233 = vadd.f32 %v747, %v2232
    %v2234 = vpop.f32.mrb[0].mxu0
    %v2235 = vpop.f32.mrb[0].mxu0
    %2236 = vdwg.mxu0
    %2237 = vmatprep.subr.bf16.mxu0 %v1587
    %2238 = vmatpush1.bf16.msra.mxu0 %v1586
    %2239 = vmatprep.subr.bf16.mxu0 %v1591
    %2240 = vmatpush1.bf16.msra.mxu0 %v1590
    %2241 = vmatprep.subr.bf16.mxu0 %v1595
    %2242 = vmatpush1.bf16.msra.mxu0 %v1594
    %2243 = vmatprep.subr.bf16.mxu0 %v1599
    %2244 = vmatpush1.bf16.msra.mxu0 %v1598
    %2245 = vmatprep.subr.bf16.mxu0 %v1603
    %2246 = vmatpush1.bf16.msra.mxu0 %v1602
    %2247 = vmatprep.subr.bf16.mxu0 %v1607
    %2248 = vmatpush1.bf16.msra.mxu0 %v1606
    %2249 = vmatprep.subr.bf16.mxu0 %v1611
    %2250 = vmatpush1.bf16.msra.mxu0 %v1610
    %2251 = vmatprep.subr.bf16.mxu0 %v1615
    %2252 = vmatpush1.bf16.msra.mxu0 %v1614
    %2253 = vmatprep.subr.bf16.mxu0 %v1619
    %2254 = vmatpush1.bf16.msra.mxu0 %v1618
    %2255 = vmatprep.subr.bf16.mxu0 %v1623
    %2256 = vmatpush1.bf16.msra.mxu0 %v1622
    %2257 = vmatprep.subr.bf16.mxu0 %v1627
    %2258 = vmatpush1.bf16.msra.mxu0 %v1626
    %2259 = vmatprep.subr.bf16.mxu0 %v1631
    %2260 = vmatpush1.bf16.msra.mxu0 %v1630
    %2261 = vmatprep.subr.bf16.mxu0 %v1635
    %2262 = vmatpush1.bf16.msra.mxu0 %v1634
    %2263 = vmatprep.subr.bf16.mxu0 %v1639
    %2264 = vmatpush1.bf16.msra.mxu0 %v1638
    %2265 = vmatprep.subr.bf16.mxu0 %v1643
    %2266 = vmatpush1.bf16.msra.mxu0 %v1642
    %2267 = vmatprep.subr.bf16.mxu0 %v1647
    %2268 = vmatpush1.bf16.msra.mxu0 %v1646
    %2269 = vmatprep.mubr.bf16.mxu0 %v469
    %2270 = vmatmul.mubr.bf16.gmra.mrb[0].mxu0 %v468
    %v2271 = vpop.f32.mrb[0].mxu0
    %v2272 = vadd.f32 %v2231, %v2271
    %v2273 = vpop.f32.mrb[0].mxu0
    %v2274 = vadd.f32 %v2233, %v2273
    %v2275 = vpop.f32.mrb[0].mxu0
    %v2276 = vpop.f32.mrb[0].mxu0
    %2277 = vdwg.mxu0
    %2278 = vmatprep.subr.bf16.mxu0 %v1651
    %2279 = vmatpush1.bf16.msra.mxu0 %v1650
    %2280 = vmatprep.subr.bf16.mxu0 %v1655
    %2281 = vmatpush1.bf16.msra.mxu0 %v1654
    %2282 = vmatprep.subr.bf16.mxu0 %v1659
    %2283 = vmatpush1.bf16.msra.mxu0 %v1658
    %2284 = vmatprep.subr.bf16.mxu0 %v1663
    %2285 = vmatpush1.bf16.msra.mxu0 %v1662
    %2286 = vmatprep.subr.bf16.mxu0 %v1667
    %2287 = vmatpush1.bf16.msra.mxu0 %v1666
    %2288 = vmatprep.subr.bf16.mxu0 %v1671
    %2289 = vmatpush1.bf16.msra.mxu0 %v1670
    %2290 = vmatprep.subr.bf16.mxu0 %v1675
    %2291 = vmatpush1.bf16.msra.mxu0 %v1674
    %2292 = vmatprep.subr.bf16.mxu0 %v1679
    %2293 = vmatpush1.bf16.msra.mxu0 %v1678
    %2294 = vmatprep.subr.bf16.mxu0 %v1683
    %2295 = vmatpush1.bf16.msra.mxu0 %v1682
    %2296 = vmatprep.subr.bf16.mxu0 %v1687
    %2297 = vmatpush1.bf16.msra.mxu0 %v1686
    %2298 = vmatprep.subr.bf16.mxu0 %v1691
    %2299 = vmatpush1.bf16.msra.mxu0 %v1690
    %2300 = vmatprep.subr.bf16.mxu0 %v1695
    %2301 = vmatpush1.bf16.msra.mxu0 %v1694
    %2302 = vmatprep.subr.bf16.mxu0 %v1699
    %2303 = vmatpush1.bf16.msra.mxu0 %v1698
    %2304 = vmatprep.subr.bf16.mxu0 %v1703
    %2305 = vmatpush1.bf16.msra.mxu0 %v1702
    %2306 = vmatprep.subr.bf16.mxu0 %v1707
    %2307 = vmatpush1.bf16.msra.mxu0 %v1706
    %2308 = vmatprep.subr.bf16.mxu0 %v1711
    %2309 = vmatpush1.bf16.msra.mxu0 %v1710
    %2310 = vmatprep.mubr.bf16.mxu0 %v471
    %2311 = vmatmul.mubr.bf16.gmra.mrb[0].mxu0 %v470
    %v2312 = vpop.f32.mrb[0].mxu0
    %v2313 = vadd.f32 %v2272, %v2312
    %v2314 = vpop.f32.mrb[0].mxu0
    %v2315 = vadd.f32 %v2274, %v2314
    %v2316 = vpop.f32.mrb[0].mxu0
    %v2317 = vpop.f32.mrb[0].mxu0
    %2318 = vdwg.mxu0
    %2319 = vmatprep.subr.bf16.mxu0 %v1715
    %2320 = vmatpush1.bf16.msra.mxu0 %v1714
    %2321 = vmatprep.subr.bf16.mxu0 %v1719
    %2322 = vmatpush1.bf16.msra.mxu0 %v1718
    %2323 = vmatprep.subr.bf16.mxu0 %v1723
    %2324 = vmatpush1.bf16.msra.mxu0 %v1722
    %2325 = vmatprep.subr.bf16.mxu0 %v1727
    %2326 = vmatpush1.bf16.msra.mxu0 %v1726
    %2327 = vmatprep.subr.bf16.mxu0 %v1731
    %2328 = vmatpush1.bf16.msra.mxu0 %v1730
    %2329 = vmatprep.subr.bf16.mxu0 %v1735
    %2330 = vmatpush1.bf16.msra.mxu0 %v1734
    %2331 = vmatprep.subr.bf16.mxu0 %v1739
    %2332 = vmatpush1.bf16.msra.mxu0 %v1738
    %2333 = vmatprep.subr.bf16.mxu0 %v1743
    %2334 = vmatpush1.bf16.msra.mxu0 %v1742
    %2335 = vmatprep.subr.bf16.mxu0 %v1747
    %2336 = vmatpush1.bf16.msra.mxu0 %v1746
    %2337 = vmatprep.subr.bf16.mxu0 %v1751
    %2338 = vmatpush1.bf16.msra.mxu0 %v1750
    %2339 = vmatprep.subr.bf16.mxu0 %v1755
    %2340 = vmatpush1.bf16.msra.mxu0 %v1754
    %2341 = vmatprep.subr.bf16.mxu0 %v1759
    %2342 = vmatpush1.bf16.msra.mxu0 %v1758
    %2343 = vmatprep.subr.bf16.mxu0 %v1763
    %2344 = vmatpush1.bf16.msra.mxu0 %v1762
    %2345 = vmatprep.subr.bf16.mxu0 %v1767
    %2346 = vmatpush1.bf16.msra.mxu0 %v1766
    %2347 = vmatprep.subr.bf16.mxu0 %v1771
    %2348 = vmatpush1.bf16.msra.mxu0 %v1770
    %2349 = vmatprep.subr.bf16.mxu0 %v1775
    %2350 = vmatpush1.bf16.msra.mxu0 %v1774
    %2351 = vmatprep.mubr.bf16.mxu0 %v473
    %2352 = vmatmul.mubr.bf16.gmra.mrb[0].mxu0 %v472
    %v2353 = vpop.f32.mrb[0].mxu0
    %v2354 = vadd.f32 %v2313, %v2353
    %v2355 = vpop.f32.mrb[0].mxu0
    %v2356 = vadd.f32 %v2315, %v2355
    %v2357 = vpop.f32.mrb[0].mxu0
    %v2358 = vpop.f32.mrb[0].mxu0
    %2359 = vdwg.mxu0
    %v2360 = vmax.f32 %v2190, 0.0
    %v2361 = vmax.f32 %v2192, 0.0
    %v2362 = vmax.f32 %v2354, 0.0
    %v2363 = vmax.f32 %v2356, 0.0
    %v2364 = vpack.c.bf16 %v2360, %v2360
    %v2365 = vpack.c.bf16 %v2361, %v2361
    %v2366 = vpack.c.bf16 %v2362, %v2362
    %v2367 = vpack.c.bf16 %v2363, %v2363
    %v2368 = vld [vmem:[#allocation10] sm:$0xf]
    %v2369 = vld [vmem:[#allocation10 + $0x4] sm:$0xf]
    %v2370 = vld [vmem:[#allocation10 + $0x8] sm:$0xf]
    %v2371 = vld [vmem:[#allocation10 + $0xc] sm:$0xf]
    %v2372 = vld [vmem:[#allocation10 + $0x10] sm:$0xf]
    %v2373 = vld [vmem:[#allocation10 + $0x14] sm:$0xf]
    %v2374 = vld [vmem:[#allocation10 + $0x18] sm:$0xf]
    %v2375 = vld [vmem:[#allocation10 + $0x1c] sm:$0xf]
    %v2376 = vld [vmem:[#allocation10 + $0x20] sm:$0xf]
    %v2377 = vld [vmem:[#allocation10 + $0x24] sm:$0xf]
    %v2378 = vld [vmem:[#allocation10 + $0x28] sm:$0xf]
    %v2379 = vld [vmem:[#allocation10 + $0x2c] sm:$0xf]
    %v2380 = vld [vmem:[#allocation10 + $0x30] sm:$0xf]
    %v2381 = vld [vmem:[#allocation10 + $0x34] sm:$0xf]
    %v2382 = vld [vmem:[#allocation10 + $0x38] sm:$0xf]
    %v2383 = vld [vmem:[#allocation10 + $0x3c] sm:$0xf]
    %v2384 = vld [vmem:[#allocation10 + $0x40] sm:$0xf]
    %v2385 = vld [vmem:[#allocation10 + $0x44] sm:$0xf]
    %v2386 = vld [vmem:[#allocation10 + $0x48] sm:$0xf]
    %v2387 = vld [vmem:[#allocation10 + $0x4c] sm:$0xf]
    %v2388 = vld [vmem:[#allocation10 + $0x50] sm:$0xf]
    %v2389 = vld [vmem:[#allocation10 + $0x54] sm:$0xf]
    %v2390 = vld [vmem:[#allocation10 + $0x58] sm:$0xf]
    %v2391 = vld [vmem:[#allocation10 + $0x5c] sm:$0xf]
    %v2392 = vld [vmem:[#allocation10 + $0x60] sm:$0xf]
    %v2393 = vld [vmem:[#allocation10 + $0x64] sm:$0xf]
    %v2394 = vld [vmem:[#allocation10 + $0x68] sm:$0xf]
    %v2395 = vld [vmem:[#allocation10 + $0x6c] sm:$0xf]
    %v2396 = vld [vmem:[#allocation10 + $0x70] sm:$0xf]
    %v2397 = vld [vmem:[#allocation10 + $0x74] sm:$0xf]
    %v2398 = vld [vmem:[#allocation10 + $0x78] sm:$0xf]
    %v2399 = vld [vmem:[#allocation10 + $0x7c] sm:$0xf]
    %v2400 = vld [vmem:[#allocation10 + $0x80] sm:$0xf]
    %v2401 = vld [vmem:[#allocation10 + $0x84] sm:$0xf]
    %v2402 = vld [vmem:[#allocation10 + $0x88] sm:$0xf]
    %v2403 = vld [vmem:[#allocation10 + $0x8c] sm:$0xf]
    %v2404 = vld [vmem:[#allocation10 + $0x90] sm:$0xf]
    %v2405 = vld [vmem:[#allocation10 + $0x94] sm:$0xf]
    %v2406 = vld [vmem:[#allocation10 + $0x98] sm:$0xf]
    %v2407 = vld [vmem:[#allocation10 + $0x9c] sm:$0xf]
    %v2408 = vld [vmem:[#allocation10 + $0xa0] sm:$0xf]
    %v2409 = vld [vmem:[#allocation10 + $0xa4] sm:$0xf]
    %v2410 = vld [vmem:[#allocation10 + $0xa8] sm:$0xf]
    %v2411 = vld [vmem:[#allocation10 + $0xac] sm:$0xf]
    %v2412 = vld [vmem:[#allocation10 + $0xb0] sm:$0xf]
    %v2413 = vld [vmem:[#allocation10 + $0xb4] sm:$0xf]
    %v2414 = vld [vmem:[#allocation10 + $0xb8] sm:$0xf]
    %v2415 = vld [vmem:[#allocation10 + $0xbc] sm:$0xf]
    %v2416 = vld [vmem:[#allocation10 + $0xc0] sm:$0xf]
    %v2417 = vld [vmem:[#allocation10 + $0xc4] sm:$0xf]
    %v2418 = vld [vmem:[#allocation10 + $0xc8] sm:$0xf]
    %v2419 = vld [vmem:[#allocation10 + $0xcc] sm:$0xf]
    %v2420 = vld [vmem:[#allocation10 + $0xd0] sm:$0xf]
    %v2421 = vld [vmem:[#allocation10 + $0xd4] sm:$0xf]
    %v2422 = vld [vmem:[#allocation10 + $0xd8] sm:$0xf]
    %v2423 = vld [vmem:[#allocation10 + $0xdc] sm:$0xf]
    %v2424 = vld [vmem:[#allocation10 + $0xe0] sm:$0xf]
    %v2425 = vld [vmem:[#allocation10 + $0xe4] sm:$0xf]
    %v2426 = vld [vmem:[#allocation10 + $0xe8] sm:$0xf]
    %v2427 = vld [vmem:[#allocation10 + $0xec] sm:$0xf]
    %v2428 = vld [vmem:[#allocation10 + $0xf0] sm:$0xf]
    %v2429 = vld [vmem:[#allocation10 + $0xf4] sm:$0xf]
    %v2430 = vld [vmem:[#allocation10 + $0xf8] sm:$0xf]
    %v2431 = vld [vmem:[#allocation10 + $0xfc] sm:$0xf]
    %v2432 = vld [vmem:[%s7] sm:$0x1]
    %v2434 = vlaneseq
    %v2435 = vshrl.u32 %v2434, 7
    %v2436 = vsub.s32 0, %v2435
    %v2437 = vrot.slane %v2432, %v2436
    %v2503 = vunpack.c.l.b16 %v2368
    %v2504 = vunpack.c.l.b16 %v2369
    %v2505 = vunpack.c.l.b16 %v2370
    %v2506 = vunpack.c.l.b16 %v2371
    %v2507 = vunpack.c.l.b16 %v2372
    %v2508 = vunpack.c.l.b16 %v2373
    %v2509 = vunpack.c.l.b16 %v2374
    %v2510 = vunpack.c.l.b16 %v2375
    %v2511 = vunpack.c.l.b16 %v2376
    %v2512 = vunpack.c.l.b16 %v2377
    %v2513 = vunpack.c.l.b16 %v2378
    %v2514 = vunpack.c.l.b16 %v2379
    %v2515 = vunpack.c.l.b16 %v2380
    %v2516 = vunpack.c.l.b16 %v2381
    %v2517 = vunpack.c.l.b16 %v2382
    %v2518 = vunpack.c.l.b16 %v2383
    %v2519 = vunpack.c.l.b16 %v2384
    %v2520 = vunpack.c.l.b16 %v2385
    %v2521 = vunpack.c.l.b16 %v2386
    %v2522 = vunpack.c.l.b16 %v2387
    %v2523 = vunpack.c.l.b16 %v2388
    %v2524 = vunpack.c.l.b16 %v2389
    %v2525 = vunpack.c.l.b16 %v2390
    %v2526 = vunpack.c.l.b16 %v2391
    %v2527 = vunpack.c.l.b16 %v2392
    %v2528 = vunpack.c.l.b16 %v2393
    %v2529 = vunpack.c.l.b16 %v2394
    %v2530 = vunpack.c.l.b16 %v2395
    %v2531 = vunpack.c.l.b16 %v2396
    %v2532 = vunpack.c.l.b16 %v2397
    %v2533 = vunpack.c.l.b16 %v2398
    %v2534 = vunpack.c.l.b16 %v2399
    %v2535 = vunpack.c.l.b16 %v2400
    %v2536 = vunpack.c.l.b16 %v2401
    %v2537 = vunpack.c.l.b16 %v2402
    %v2538 = vunpack.c.l.b16 %v2403
    %v2539 = vunpack.c.l.b16 %v2404
    %v2540 = vunpack.c.l.b16 %v2405
    %v2541 = vunpack.c.l.b16 %v2406
    %v2542 = vunpack.c.l.b16 %v2407
    %v2543 = vunpack.c.l.b16 %v2408
    %v2544 = vunpack.c.l.b16 %v2409
    %v2545 = vunpack.c.l.b16 %v2410
    %v2546 = vunpack.c.l.b16 %v2411
    %v2547 = vunpack.c.l.b16 %v2412
    %v2548 = vunpack.c.l.b16 %v2413
    %v2549 = vunpack.c.l.b16 %v2414
    %v2550 = vunpack.c.l.b16 %v2415
    %v2551 = vunpack.c.l.b16 %v2416
    %v2552 = vunpack.c.l.b16 %v2417
    %v2553 = vunpack.c.l.b16 %v2418
    %v2554 = vunpack.c.l.b16 %v2419
    %v2555 = vunpack.c.l.b16 %v2420
    %v2556 = vunpack.c.l.b16 %v2421
    %v2557 = vunpack.c.l.b16 %v2422
    %v2558 = vunpack.c.l.b16 %v2423
    %v2559 = vunpack.c.l.b16 %v2424
    %v2560 = vunpack.c.l.b16 %v2425
    %v2561 = vunpack.c.l.b16 %v2426
    %v2562 = vunpack.c.l.b16 %v2427
    %v2563 = vunpack.c.l.b16 %v2428
    %v2564 = vunpack.c.l.b16 %v2429
    %v2565 = vunpack.c.l.b16 %v2430
    %v2566 = vunpack.c.l.b16 %v2431
    %v2567 = vpack.c.b16 %v2504, %v2503
    %v2568 = vpack.c.b16 %v2506, %v2505
    %v2569 = vpack.c.b16 %v2508, %v2507
    %v2570 = vpack.c.b16 %v2510, %v2509
    %v2571 = vpack.c.b16 %v2512, %v2511
    %v2572 = vpack.c.b16 %v2514, %v2513
    %v2573 = vpack.c.b16 %v2516, %v2515
    %v2574 = vpack.c.b16 %v2518, %v2517
    %v2575 = vpack.c.b16 %v2520, %v2519
    %v2576 = vpack.c.b16 %v2522, %v2521
    %v2577 = vpack.c.b16 %v2524, %v2523
    %v2578 = vpack.c.b16 %v2526, %v2525
    %v2579 = vpack.c.b16 %v2528, %v2527
    %v2580 = vpack.c.b16 %v2530, %v2529
    %v2581 = vpack.c.b16 %v2532, %v2531
    %v2582 = vpack.c.b16 %v2534, %v2533
    %v2583 = vpack.c.b16 %v2536, %v2535
    %v2584 = vpack.c.b16 %v2538, %v2537
    %v2585 = vpack.c.b16 %v2540, %v2539
    %v2586 = vpack.c.b16 %v2542, %v2541
    %v2587 = vpack.c.b16 %v2544, %v2543
    %v2588 = vpack.c.b16 %v2546, %v2545
    %v2589 = vpack.c.b16 %v2548, %v2547
    %v2590 = vpack.c.b16 %v2550, %v2549
    %v2591 = vpack.c.b16 %v2552, %v2551
    %v2592 = vpack.c.b16 %v2554, %v2553
    %v2593 = vpack.c.b16 %v2556, %v2555
    %v2594 = vpack.c.b16 %v2558, %v2557
    %v2595 = vpack.c.b16 %v2560, %v2559
    %v2596 = vpack.c.b16 %v2562, %v2561
    %v2597 = vpack.c.b16 %v2564, %v2563
    %v2598 = vpack.c.b16 %v2566, %v2565
    %2631 = vmatprep.subr.bf16.mxu0 0
    %2632 = vmatpush1.bf16.msra.mxu0 %v2567
    %2633 = vmatprep.subr.bf16.mxu0 0
    %2634 = vmatpush1.bf16.msra.mxu0 %v2568
    %2635 = vmatprep.subr.bf16.mxu0 0
    %2636 = vmatpush1.bf16.msra.mxu0 %v2569
    %2637 = vmatprep.subr.bf16.mxu0 0
    %2638 = vmatpush1.bf16.msra.mxu0 %v2570
    %2639 = vmatprep.subr.bf16.mxu0 0
    %2640 = vmatpush1.bf16.msra.mxu0 %v2571
    %2641 = vmatprep.subr.bf16.mxu0 0
    %2642 = vmatpush1.bf16.msra.mxu0 %v2572
    %2643 = vmatprep.subr.bf16.mxu0 0
    %2644 = vmatpush1.bf16.msra.mxu0 %v2573
    %2645 = vmatprep.subr.bf16.mxu0 0
    %2646 = vmatpush1.bf16.msra.mxu0 %v2574
    %2647 = vmatprep.subr.bf16.mxu0 0
    %2648 = vmatpush1.bf16.msra.mxu0 %v2575
    %2649 = vmatprep.subr.bf16.mxu0 0
    %2650 = vmatpush1.bf16.msra.mxu0 %v2576
    %2651 = vmatprep.subr.bf16.mxu0 0
    %2652 = vmatpush1.bf16.msra.mxu0 %v2577
    %2653 = vmatprep.subr.bf16.mxu0 0
    %2654 = vmatpush1.bf16.msra.mxu0 %v2578
    %2655 = vmatprep.subr.bf16.mxu0 0
    %2656 = vmatpush1.bf16.msra.mxu0 %v2579
    %2657 = vmatprep.subr.bf16.mxu0 0
    %2658 = vmatpush1.bf16.msra.mxu0 %v2580
    %2659 = vmatprep.subr.bf16.mxu0 0
    %2660 = vmatpush1.bf16.msra.mxu0 %v2581
    %2661 = vmatprep.subr.bf16.mxu0 0
    %2662 = vmatpush1.bf16.msra.mxu0 %v2582
    %2663 = vmatprep.mubr.bf16.mxu0 %v2365
    %2664 = vmatmul.mubr.bf16.gmra.mrb[0].mxu0 %v2364
    %v2665 = vpop.f32.mrb[0].mxu0
    %v2666 = vadd.f32 %v2437, %v2665
    %v2667 = vpop.f32.mrb[0].mxu0
    %v2668 = vpop.f32.mrb[0].mxu0
    %v2669 = vpop.f32.mrb[0].mxu0
    %2670 = vdwg.mxu0
    %2671 = vmatprep.subr.bf16.mxu0 0
    %2672 = vmatpush1.bf16.msra.mxu0 %v2583
    %2673 = vmatprep.subr.bf16.mxu0 0
    %2674 = vmatpush1.bf16.msra.mxu0 %v2584
    %2675 = vmatprep.subr.bf16.mxu0 0
    %2676 = vmatpush1.bf16.msra.mxu0 %v2585
    %2677 = vmatprep.subr.bf16.mxu0 0
    %2678 = vmatpush1.bf16.msra.mxu0 %v2586
    %2679 = vmatprep.subr.bf16.mxu0 0
    %2680 = vmatpush1.bf16.msra.mxu0 %v2587
    %2681 = vmatprep.subr.bf16.mxu0 0
    %2682 = vmatpush1.bf16.msra.mxu0 %v2588
    %2683 = vmatprep.subr.bf16.mxu0 0
    %2684 = vmatpush1.bf16.msra.mxu0 %v2589
    %2685 = vmatprep.subr.bf16.mxu0 0
    %2686 = vmatpush1.bf16.msra.mxu0 %v2590
    %2687 = vmatprep.subr.bf16.mxu0 0
    %2688 = vmatpush1.bf16.msra.mxu0 %v2591
    %2689 = vmatprep.subr.bf16.mxu0 0
    %2690 = vmatpush1.bf16.msra.mxu0 %v2592
    %2691 = vmatprep.subr.bf16.mxu0 0
    %2692 = vmatpush1.bf16.msra.mxu0 %v2593
    %2693 = vmatprep.subr.bf16.mxu0 0
    %2694 = vmatpush1.bf16.msra.mxu0 %v2594
    %2695 = vmatprep.subr.bf16.mxu0 0
    %2696 = vmatpush1.bf16.msra.mxu0 %v2595
    %2697 = vmatprep.subr.bf16.mxu0 0
    %2698 = vmatpush1.bf16.msra.mxu0 %v2596
    %2699 = vmatprep.subr.bf16.mxu0 0
    %2700 = vmatpush1.bf16.msra.mxu0 %v2597
    %2701 = vmatprep.subr.bf16.mxu0 0
    %2702 = vmatpush1.bf16.msra.mxu0 %v2598
    %2703 = vmatprep.mubr.bf16.mxu0 %v2367
    %2704 = vmatmul.mubr.bf16.gmra.mrb[0].mxu0 %v2366
    %v2705 = vpop.f32.mrb[0].mxu0
    %v2706 = vadd.f32 %v2666, %v2705
    %v2707 = vpop.f32.mrb[0].mxu0
    %v2708 = vpop.f32.mrb[0].mxu0
    %v2709 = vpop.f32.mrb[0].mxu0
    %2710 = vdwg.mxu0
    %2711 = vst [vmem:[#allocation12] sm:$0x3] %v2706
    // Predicated region
    $region46: #{tpu_custom_call.1} parent=1 // pred_check
      _
    $region47: #{tpu_custom_call.1} parent=1 // pred_check_branch
      %2713 = sbr.rel (0) target = $region49
    $region48: #{tpu_custom_call.1} parent=1 // pred_region
      %s2715 = ssub.s32 32, 32
      %2716 = vsyncadd [#allocation6], %s2715
      %s2718 = sshll.u32 [#allocation12], 4
      %s2719 = int_to_ptr.vmem [resolvable:$true] %s2718
      %2721 = dma.vmem_to_hbm [thread:$0]  %s2719, 32, %s8, [#allocation6]
    $region49: #{tpu_custom_call.1} parent=1 // pred_fallthru
      _
    // Predicated region
    $region50: #{tpu_custom_call.1} parent=1 // pred_check
      _
    $region51: #{tpu_custom_call.1} parent=1 // pred_check_branch
      %2723 = sbr.rel (0) target = $region53
    $region52: #{tpu_custom_call.1} parent=1 // pred_region
      %2724 = dma.done [#allocation6], 32
    $region53: #{tpu_custom_call.1} parent=1 // pred_fallthru
      _
    %2725 = vsyncpa [#allocation5], 1
    %2726 = vsyncpa [#allocation8], 1
    %2727 = vsyncpa [#allocation11], 1
    %2728 = vsyncpa [#allocation6], 1

</llo_original>
